<compile_context>
chip_gen: v7x
topology: tpu7x:2x2x1
jax: 0.10.0
libtpu: 0.0.40
codegen_flags: <defaults>
</compile_context>

<pallas_src>
import functools
import math

import jax
import jax.numpy as jnp
from jax import lax
from jax.experimental import pallas as pl
from jax.experimental.pallas import tpu as pltpu


# ----------------------------------------------------------------------------
# Fully fused DecoderRNN kernel (single gridless invocation, VMEM-resident).
# ----------------------------------------------------------------------------
def _make_decoder_kernel(*, S, B_pad, H, L, D):
    f32 = jnp.float32
    H2 = 2 * H
    n_w = 4 * L
    n_wo = 3 if D == 2 else 2          # wo_fwd, [wo_bwd], wo_ctx
    have_slab = L > 1

    def kernel(*refs):
        x_ref, h0_ref, ctx_ref = refs[0:3]
        i = 3
        w_refs = refs[i:i + n_w]; i += n_w
        head = refs[i:i + n_wo + 1]; i += n_wo + 1
        out_ref, hlast_ref = refs[i], refs[i + 1]; i += 2
        gi_ref = refs[i]; i += 1
        slabs = refs[i:i + 2 * D] if have_slab else ()   # (S*B_pad, H) each

        fwd0 = None            # last-layer forward output at t=0
        bwd0 = None            # last-layer backward output at t=0 (= h_last)

        for layer in range(L):
            wih_ref, whh_ref, bi_ref, bhn_ref = w_refs[4 * layer:4 * layer + 4]
            last = (layer == L - 1)
            rd_p = (layer - 1) % 2          # slab plane written by prev layer
            wr_p = layer % 2                # slab plane written by this layer

            for d in range(D):
                idx = layer * D + d

                # ---- hoisted input path: one batched matmul over ALL
                #      timesteps per (layer, dir) component -------------------
                w_in = wih_ref[d]                                  # (in, 3H)
                if layer == 0:
                    gi = jnp.dot(x_ref[...], w_in,
                                 preferred_element_type=f32)
                else:
                    gi = jnp.dot(slabs[rd_p * D + 0][...], w_in[0:H, :],
                                 preferred_element_type=f32)
                    if D == 2:
                        gi = gi + jnp.dot(slabs[rd_p * D + 1][...],
                                          w_in[H:2 * H, :],
                                          preferred_element_type=f32)
                gi_ref[...] = gi + bi_ref[d]                # (S*B_pad, 3H)

                # ---- serial recurrence: ONE packed MXU matmul per step ------
                whh = whh_ref[d]                                   # (H, 3H)
                b_hn = jnp.broadcast_to(bhn_ref[d], (B_pad, H))    # hoisted
                h_init = h0_ref[idx]                               # (B_pad, H)

                def step(s, carry):
                    h, o0 = carry
                    # backward direction: time reversal via indexing only
                    t = s if d == 0 else (S - 1) - s
                    row = pl.multiple_of(t * B_pad, B_pad)
                    gi_t = gi_ref[pl.ds(row, B_pad), :]            # (B, 3H)
                    gh = jnp.dot(h, whh, preferred_element_type=f32)
                    rz = jax.nn.sigmoid(gi_t[:, :H2] + gh[:, :H2])
                    r, z = rz[:, :H], rz[:, H:]
                    n = jnp.tanh(gi_t[:, H2:] + r * (gh[:, H2:] + b_hn))
                    h_new = (1.0 - z) * n + z * h
                    if not last:
                        # feeds the next layer (per-direction VMEM slab)
                        slabs[wr_p * D + d][pl.ds(row, B_pad), :] = h_new
                        o0_new = o0
                    elif d == 0:
                        o0_new = jnp.where(t == 0, h_new, o0)      # output[0]
                    else:
                        o0_new = o0
                    return (h_new, o0_new)

                h_fin, o0 = lax.fori_loop(
                    0, S, step, (h_init, jnp.zeros((B_pad, H), f32)))

                # final hidden state, packed lane-dense as (B_pad, L*D*H)
                hlast_ref[:, idx * H:(idx + 1) * H] = h_fin
                if last:
                    if d == 0:
                        fwd0 = o0
                    else:
                        bwd0 = h_fin

        # ---- fused Linear head: split-row matmuls, O padded to 128 lanes ----
        if D == 2:
            wo_f, wo_b, wo_c, bo = head
            logits = (jnp.dot(fwd0, wo_f[...], preferred_element_type=f32)
                      + jnp.dot(bwd0, wo_b[...], preferred_element_type=f32))
        else:
            wo_f, wo_c, bo = head
            logits = jnp.dot(fwd0, wo_f[...], preferred_element_type=f32)
        logits = logits + jnp.dot(ctx_ref[...], wo_c[...],
                                  preferred_element_type=f32)
        out_ref[...] = logits + bo[...]

    return kernel


@functools.partial(jax.jit,
                   static_argnames=("n_layers", "direction", "output_size"))
def decoder_rnn_forward(packed, inp, hidden, context_vec, *,
                        n_layers, direction, output_size):
    """Fused forward: (logits, hidden_out) from one gridless pallas_call."""
    S, B, in0 = inp.shape
    L, D = n_layers, direction
    H = hidden.shape[-1]
    A = context_vec.shape[-1]
    O_pad = packed["bo"].shape[-1]
    B_pad = max(8, ((B + 7) // 8) * 8)          # 8-aligned sublane batch

    # Pad batch and flatten (S, B) -> (S*B_pad) so the input-path matmul is a
    # single big slab matmul; all padding/reshaping is wrapper-side plumbing.
    x_slab = jnp.zeros((S, B_pad, in0), jnp.float32).at[:, :B, :].set(inp)
    x_slab = x_slab.reshape(S * B_pad, in0)
    h0 = jnp.zeros((L * D, B_pad, H), jnp.float32).at[:, :B, :].set(hidden)
    ctx = jnp.zeros((B_pad, A), jnp.float32).at[:B, :].set(context_vec)

    inputs = [x_slab, h0, ctx]
    for l in range(L):
        inputs.extend(packed["layers"][l])
    inputs.append(packed["wo_f"])
    if D == 2:
        inputs.append(packed["wo_b"])
    inputs.append(packed["wo_c"])
    inputs.append(packed["bo"])

    kernel = _make_decoder_kernel(S=S, B_pad=B_pad, H=H, L=L, D=D)

    scratch = [pltpu.VMEM((S * B_pad, 3 * H), jnp.float32)]     # gi slab
    if L > 1:                                                   # layer I/O
        scratch += [pltpu.VMEM((S * B_pad, H), jnp.float32)
                    for _ in range(2 * D)]

    vmem_spec = pl.BlockSpec(memory_space=pltpu.MemorySpace.VMEM)
    out_pad, hlast_slab = pl.pallas_call(
        kernel,
        out_shape=(jax.ShapeDtypeStruct((B_pad, O_pad), jnp.float32),
                   jax.ShapeDtypeStruct((B_pad, L * D * H), jnp.float32)),
        in_specs=[vmem_spec] * len(inputs),
        out_specs=(vmem_spec, vmem_spec),
        scratch_shapes=scratch,
        compiler_params=pltpu.CompilerParams(
            vmem_limit_bytes=32 * 1024 * 1024),
    )(*inputs)

    out = out_pad[:B, :output_size]
    hidden_out = jnp.transpose(
        hlast_slab[:B, :].reshape(B, L * D, H), (1, 0, 2))
    return out, hidden_out


# ----------------------------------------------------------------------------
# Parameters: PyTorch-layout init + one-time packing for the kernel.
# ----------------------------------------------------------------------------
def init_decoder_params(key, input_size, hidden_size, output_size, attn_size,
                        n_layers, direction):
    params = {"gru": []}
    k_gru = 1.0 / math.sqrt(hidden_size)
    for layer in range(n_layers):
        in_sz = input_size if layer == 0 else hidden_size * direction
        for _d in range(direction):
            key, k1, k2, k3, k4 = jax.random.split(key, 5)
            w_ih = jax.random.uniform(k1, (3 * hidden_size, in_sz),
                                      jnp.float32, -k_gru, k_gru)
            w_hh = jax.random.uniform(k2, (3 * hidden_size, hidden_size),
                                      jnp.float32, -k_gru, k_gru)
            b_ih = jax.random.uniform(k3, (3 * hidden_size,),
                                      jnp.float32, -k_gru, k_gru)
            b_hh = jax.random.uniform(k4, (3 * hidden_size,),
                                      jnp.float32, -k_gru, k_gru)
            params["gru"].append((w_ih, w_hh, b_ih, b_hh))
    fan_in = hidden_size * direction + attn_size
    k_lin = 1.0 / math.sqrt(fan_in)
    key, k1, k2 = jax.random.split(key, 3)
    params["out_w"] = jax.random.uniform(k1, (output_size, fan_in),
                                         jnp.float32, -k_lin, k_lin)
    params["out_b"] = jax.random.uniform(k2, (output_size,),
                                         jnp.float32, -k_lin, k_lin)
    return params


def pack_decoder_params(params, hidden_size, n_layers, direction):
    """One-time prep: gate-packed (in,3H)/(H,3H) weights, pre-summed r/z
    biases, output weights split per row-block and zero-padded to 128 lanes."""
    H, D = hidden_size, direction
    layers = []
    for layer in range(n_layers):
        wih_l, whh_l, bi_l, bhn_l = [], [], [], []
        for d in range(D):
            w_ih, w_hh, b_ih, b_hh = params["gru"][layer * D + d]
            wih_l.append(jnp.concatenate(
                [w_ih[0:H].T, w_ih[H:2 * H].T, w_ih[2 * H:3 * H].T], axis=1))
            whh_l.append(jnp.concatenate(
                [w_hh[0:H].T, w_hh[H:2 * H].T, w_hh[2 * H:3 * H].T], axis=1))
            bi_l.append(jnp.concatenate(
                [b_ih[0:H] + b_hh[0:H],                 # r: b_ir + b_hr
                 b_ih[H:2 * H] + b_hh[H:2 * H],         # z: b_iz + b_hz
                 b_ih[2 * H:3 * H]]).reshape(1, 3 * H)) # n: b_in only
            bhn_l.append(b_hh[2 * H:3 * H].reshape(1, H))   # inside r*(...)
        layers.append((jnp.stack(wih_l).astype(jnp.float32),   # (D, in, 3H)
                       jnp.stack(whh_l).astype(jnp.float32),   # (D, H, 3H)
                       jnp.stack(bi_l).astype(jnp.float32),    # (D, 1, 3H)
                       jnp.stack(bhn_l).astype(jnp.float32)))  # (D, 1, H)

    W, b = params["out_w"], params["out_b"]        # (O, D*H + A), (O,)
    O = W.shape[0]
    O_pad = ((O + 127) // 128) * 128
    wo_t = jnp.zeros((W.shape[1], O_pad), jnp.float32).at[:, :O].set(W.T)
    packed = {"layers": layers,
              "wo_f": wo_t[0:H],                    # (H, O_pad)
              "wo_c": wo_t[D * H:],                 # (A, O_pad)
              "bo": jnp.zeros((1, O_pad), jnp.float32).at[0, :O].set(b)}
    if D == 2:
        packed["wo_b"] = wo_t[H:2 * H]              # (H, O_pad)
    return packed


# ----------------------------------------------------------------------------
# Pure-JAX reference (PyTorch-semantics check)
# ----------------------------------------------------------------------------
def _gru_cell_ref(x, h, w_ih, w_hh, b_ih, b_hh):
    H = h.shape[-1]
    gi = x @ w_ih.T + b_ih
    gh = h @ w_hh.T + b_hh
    r = jax.nn.sigmoid(gi[:, :H] + gh[:, :H])
    z = jax.nn.sigmoid(gi[:, H:2 * H] + gh[:, H:2 * H])
    n = jnp.tanh(gi[:, 2 * H:] + r * gh[:, 2 * H:])
    return (1.0 - z) * n + z * h


def _decoder_ref(params, inp, hidden, context_vec, n_layers, direction):
    layer_input = inp
    h_finals = []
    for layer in range(n_layers):
        dir_outs = []
        for d in range(direction):
            idx = layer * direction + d
            w_ih, w_hh, b_ih, b_hh = params["gru"][idx]
            xin = layer_input if d == 0 else layer_input[::-1]
            h = hidden[idx]
            outs = []
            for t in range(xin.shape[0]):
                h = _gru_cell_ref(xin[t], h, w_ih, w_hh, b_ih, b_hh)
                outs.append(h)
            out = jnp.stack(outs, axis=0)
            if d == 1:
                out = out[::-1]
            dir_outs.append(out)
            h_finals.append(h)
        layer_input = (jnp.concatenate(dir_outs, axis=-1)
                       if direction == 2 else dir_outs[0])
    hidden_out = jnp.stack(h_finals, axis=0)
    cat = jnp.concatenate([layer_input[0], context_vec], axis=1)
    out = cat @ params["out_w"].T + params["out_b"]
    return out, hidden_out


# ----------------------------------------------------------------------------
if __name__ == "__main__":
    # Module config (matches DecoderRNN.__init__ signature)
    input_size, hidden_size, output_size = 16, 32, 10
    attn_size, n_layers, direction, dropout = 8, 2, 2, 0.0
    S, B = 5, 2  # seq_len, batch

    key = jax.random.PRNGKey(0)
    key, kp, kx, kh, kc = jax.random.split(key, 5)
    params = init_decoder_params(kp, input_size, hidden_size, output_size,
                                 attn_size, n_layers, direction)
    packed = pack_decoder_params(params, hidden_size, n_layers, direction)

    inp = jax.random.normal(kx, (S, B, input_size), jnp.float32)
    hidden = jax.random.normal(kh, (n_layers * direction, B, hidden_size),
                               jnp.float32)
    context_vec = jax.random.normal(kc, (B, attn_size), jnp.float32)

    out, h_n = decoder_rnn_forward(packed, inp, hidden, context_vec,
                                   n_layers=n_layers, direction=direction,
                                   output_size=output_size)
    out = jax.block_until_ready(out)
    h_n = jax.block_until_ready(h_n)

    out_ref, h_ref = _decoder_ref(params, inp, hidden, context_vec,
                                  n_layers, direction)
    assert out.shape == (B, output_size)
    assert h_n.shape == (n_layers * direction, B, hidden_size)
    assert jnp.allclose(out, out_ref, atol=1e-4, rtol=1e-4), \
        float(jnp.max(jnp.abs(out - out_ref)))
    assert jnp.allclose(h_n, h_ref, atol=1e-4, rtol=1e-4), \
        float(jnp.max(jnp.abs(h_n - h_ref)))

    print("KERNEL_OK")
</pallas_src>

<mosaic_0001>
module attributes {stable_mosaic.version = 11 : i64} {
  func.func @kernel(%arg0: memref<40x16xf32, #tpu.memory_space<vmem>>, %arg1: memref<4x8x32xf32, #tpu.memory_space<vmem>>, %arg2: memref<8x8xf32, #tpu.memory_space<vmem>>, %arg3: memref<2x16x96xf32, #tpu.memory_space<vmem>>, %arg4: memref<2x32x96xf32, #tpu.memory_space<vmem>>, %arg5: memref<2x1x96xf32, #tpu.memory_space<vmem>>, %arg6: memref<2x1x32xf32, #tpu.memory_space<vmem>>, %arg7: memref<2x64x96xf32, #tpu.memory_space<vmem>>, %arg8: memref<2x32x96xf32, #tpu.memory_space<vmem>>, %arg9: memref<2x1x96xf32, #tpu.memory_space<vmem>>, %arg10: memref<2x1x32xf32, #tpu.memory_space<vmem>>, %arg11: memref<32x128xf32, #tpu.memory_space<vmem>>, %arg12: memref<32x128xf32, #tpu.memory_space<vmem>>, %arg13: memref<8x128xf32, #tpu.memory_space<vmem>>, %arg14: memref<1x128xf32, #tpu.memory_space<vmem>>, %arg15: memref<8x128xf32, #tpu.memory_space<vmem>>, %arg16: memref<8x128xf32, #tpu.memory_space<vmem>>, %arg17: memref<40x96xf32, #tpu.memory_space<vmem>>, %arg18: memref<40x32xf32, #tpu.memory_space<vmem>>, %arg19: memref<40x32xf32, #tpu.memory_space<vmem>>, %arg20: memref<40x32xf32, #tpu.memory_space<vmem>>, %arg21: memref<40x32xf32, #tpu.memory_space<vmem>>) attributes {dimension_semantics = [], scalar_prefetch = 0 : i64, scratch_operands = 5 : i64, tpu.core_type = #tpu.core_type<tc>} {
    %c0 = arith.constant 0 : index
    %c0_0 = arith.constant 0 : index
    %c0_1 = arith.constant 0 : index
    %0 = vector.load %arg3[%c0, %c0_0, %c0_1] : memref<2x16x96xf32, #tpu.memory_space<vmem>>, vector<1x16x96xf32>
    %1 = vector.shape_cast %0 : vector<1x16x96xf32> to vector<16x96xf32>
    %c0_2 = arith.constant 0 : index
    %c0_3 = arith.constant 0 : index
    %2 = vector.load %arg0[%c0_2, %c0_3] : memref<40x16xf32, #tpu.memory_space<vmem>>, vector<40x16xf32>
    %cst = arith.constant dense<0.000000e+00> : vector<40x96xf32>
    %3 = tpu.matmul %2, %1, %cst {dimension_numbers = #tpu.dot_dimension_numbers<[1], [0], [0], [1], [0, 0, 1, 1], [], []>} : vector<40x16xf32>, vector<16x96xf32>, vector<40x96xf32> -> vector<40x96xf32>
    %c0_4 = arith.constant 0 : index
    %c0_5 = arith.constant 0 : index
    %c0_6 = arith.constant 0 : index
    %4 = vector.load %arg5[%c0_4, %c0_5, %c0_6] : memref<2x1x96xf32, #tpu.memory_space<vmem>>, vector<1x1x96xf32>
    %5 = vector.shape_cast %4 : vector<1x1x96xf32> to vector<1x96xf32>
    %6 = vector.broadcast %5 : vector<1x96xf32> to vector<40x96xf32>
    %7 = arith.addf %3, %6 : vector<40x96xf32>
    %c0_7 = arith.constant 0 : index
    %c0_8 = arith.constant 0 : index
    %8 = vector.load %arg17[%c0_7, %c0_8] : memref<40x96xf32, #tpu.memory_space<vmem>>, vector<40x96xf32>
    tpu.vector_store %arg17[%c0_7, %c0_8], %7 {strides = array<i32>} : memref<40x96xf32, #tpu.memory_space<vmem>>, vector<40x96xf32>,
    %c0_9 = arith.constant 0 : index
    %c0_10 = arith.constant 0 : index
    %c0_11 = arith.constant 0 : index
    %9 = vector.load %arg4[%c0_9, %c0_10, %c0_11] : memref<2x32x96xf32, #tpu.memory_space<vmem>>, vector<1x32x96xf32>
    %10 = vector.shape_cast %9 : vector<1x32x96xf32> to vector<32x96xf32>
    %c0_12 = arith.constant 0 : index
    %c0_13 = arith.constant 0 : index
    %c0_14 = arith.constant 0 : index
    %11 = vector.load %arg6[%c0_12, %c0_13, %c0_14] : memref<2x1x32xf32, #tpu.memory_space<vmem>>, vector<1x1x32xf32>
    %12 = vector.shape_cast %11 : vector<1x1x32xf32> to vector<1x32xf32>
    %13 = vector.shape_cast %12 : vector<1x32xf32> to vector<1x32xf32>
    %14 = vector.broadcast %13 : vector<1x32xf32> to vector<8x32xf32>
    %c0_15 = arith.constant 0 : index
    %c0_16 = arith.constant 0 : index
    %c0_17 = arith.constant 0 : index
    %15 = vector.load %arg1[%c0_15, %c0_16, %c0_17] : memref<4x8x32xf32, #tpu.memory_space<vmem>>, vector<1x8x32xf32>
    %16 = vector.shape_cast %15 : vector<1x8x32xf32> to vector<8x32xf32>
    %c0_i32 = arith.constant 0 : i32
    %c5_i32 = arith.constant 5 : i32
    %17 = arith.addi %c0_i32, %c5_i32 : i32
    %c1_i32 = arith.constant 1 : i32
    %18 = scf.for %arg22 = %c0_i32 to %17 step %c1_i32 iter_args(%arg23 = %16) -> (vector<8x32xf32>)  : i32 {
      %c8_i32 = arith.constant 8 : i32
      %104 = arith.muli %arg22, %c8_i32 : i32
      %105 = tpu.assume_multiple %104, 8 : i32
      %106 = arith.index_cast %105 : i32 to index
      %c0_115 = arith.constant 0 : index
      %107 = vector.load %arg17[%106, %c0_115] : memref<40x96xf32, #tpu.memory_space<vmem>>, vector<8x96xf32>
      %cst_116 = arith.constant dense<0.000000e+00> : vector<8x96xf32>
      %108 = tpu.matmul %arg23, %10, %cst_116 {dimension_numbers = #tpu.dot_dimension_numbers<[1], [0], [0], [1], [0, 0, 1, 1], [], []>} : vector<8x32xf32>, vector<32x96xf32>, vector<8x96xf32> -> vector<8x96xf32>
      %109 = vector.extract_strided_slice %107 {offsets = [0, 0], sizes = [8, 64], strides = [1, 1]} : vector<8x96xf32> to vector<8x64xf32>
      %110 = vector.extract_strided_slice %108 {offsets = [0, 0], sizes = [8, 64], strides = [1, 1]} : vector<8x96xf32> to vector<8x64xf32>
      %111 = arith.addf %109, %110 : vector<8x64xf32>
      %112 = arith.negf %111 : vector<8x64xf32>
      %113 = math.exp %112 : vector<8x64xf32>
      %cst_117 = arith.constant 1.000000e+00 : f32
      %114 = vector.broadcast %cst_117 : f32 to vector<8x64xf32>
      %115 = arith.addf %114, %113 : vector<8x64xf32>
      %116 = arith.divf %114, %115 : vector<8x64xf32>
      %117 = vector.extract_strided_slice %116 {offsets = [0, 0], sizes = [8, 32], strides = [1, 1]} : vector<8x64xf32> to vector<8x32xf32>
      %118 = vector.extract_strided_slice %116 {offsets = [0, 32], sizes = [8, 32], strides = [1, 1]} : vector<8x64xf32> to vector<8x32xf32>
      %119 = vector.extract_strided_slice %107 {offsets = [0, 64], sizes = [8, 32], strides = [1, 1]} : vector<8x96xf32> to vector<8x32xf32>
      %120 = vector.extract_strided_slice %108 {offsets = [0, 64], sizes = [8, 32], strides = [1, 1]} : vector<8x96xf32> to vector<8x32xf32>
      %121 = arith.addf %120, %14 : vector<8x32xf32>
      %122 = arith.mulf %117, %121 : vector<8x32xf32>
      %123 = arith.addf %119, %122 : vector<8x32xf32>
      %124 = math.tanh %123 : vector<8x32xf32>
      %cst_118 = arith.constant 1.000000e+00 : f32
      %125 = vector.broadcast %cst_118 : f32 to vector<8x32xf32>
      %126 = arith.subf %125, %118 : vector<8x32xf32>
      %127 = arith.mulf %126, %124 : vector<8x32xf32>
      %128 = arith.mulf %118, %arg23 : vector<8x32xf32>
      %129 = arith.addf %127, %128 : vector<8x32xf32>
      %130 = arith.index_cast %105 : i32 to index
      %c0_119 = arith.constant 0 : index
      %131 = vector.load %arg18[%130, %c0_119] : memref<40x32xf32, #tpu.memory_space<vmem>>, vector<8x32xf32>
      tpu.vector_store %arg18[%130, %c0_119], %129 {strides = array<i32>} : memref<40x32xf32, #tpu.memory_space<vmem>>, vector<8x32xf32>,
      scf.yield %129 : vector<8x32xf32>
    }
    %c5_i32_18 = arith.constant 5 : i32
    %c0_19 = arith.constant 0 : index
    %c0_20 = arith.constant 0 : index
    %19 = vector.load %arg16[%c0_19, %c0_20] : memref<8x128xf32, #tpu.memory_space<vmem>>, vector<8x32xf32>
    tpu.vector_store %arg16[%c0_19, %c0_20], %18 {strides = array<i32>} : memref<8x128xf32, #tpu.memory_space<vmem>>, vector<8x32xf32>,
    %c1 = arith.constant 1 : index
    %c0_21 = arith.constant 0 : index
    %c0_22 = arith.constant 0 : index
    %20 = vector.load %arg3[%c1, %c0_21, %c0_22] : memref<2x16x96xf32, #tpu.memory_space<vmem>>, vector<1x16x96xf32>
    %21 = vector.shape_cast %20 : vector<1x16x96xf32> to vector<16x96xf32>
    %c0_23 = arith.constant 0 : index
    %c0_24 = arith.constant 0 : index
    %22 = vector.load %arg0[%c0_23, %c0_24] : memref<40x16xf32, #tpu.memory_space<vmem>>, vector<40x16xf32>
    %cst_25 = arith.constant dense<0.000000e+00> : vector<40x96xf32>
    %23 = tpu.matmul %22, %21, %cst_25 {dimension_numbers = #tpu.dot_dimension_numbers<[1], [0], [0], [1], [0, 0, 1, 1], [], []>} : vector<40x16xf32>, vector<16x96xf32>, vector<40x96xf32> -> vector<40x96xf32>
    %c1_26 = arith.constant 1 : index
    %c0_27 = arith.constant 0 : index
    %c0_28 = arith.constant 0 : index
    %24 = vector.load %arg5[%c1_26, %c0_27, %c0_28] : memref<2x1x96xf32, #tpu.memory_space<vmem>>, vector<1x1x96xf32>
    %25 = vector.shape_cast %24 : vector<1x1x96xf32> to vector<1x96xf32>
    %26 = vector.broadcast %25 : vector<1x96xf32> to vector<40x96xf32>
    %27 = arith.addf %23, %26 : vector<40x96xf32>
    %c0_29 = arith.constant 0 : index
    %c0_30 = arith.constant 0 : index
    %28 = vector.load %arg17[%c0_29, %c0_30] : memref<40x96xf32, #tpu.memory_space<vmem>>, vector<40x96xf32>
    tpu.vector_store %arg17[%c0_29, %c0_30], %27 {strides = array<i32>} : memref<40x96xf32, #tpu.memory_space<vmem>>, vector<40x96xf32>,
    %c1_31 = arith.constant 1 : index
    %c0_32 = arith.constant 0 : index
    %c0_33 = arith.constant 0 : index
    %29 = vector.load %arg4[%c1_31, %c0_32, %c0_33] : memref<2x32x96xf32, #tpu.memory_space<vmem>>, vector<1x32x96xf32>
    %30 = vector.shape_cast %29 : vector<1x32x96xf32> to vector<32x96xf32>
    %c1_34 = arith.constant 1 : index
    %c0_35 = arith.constant 0 : index
    %c0_36 = arith.constant 0 : index
    %31 = vector.load %arg6[%c1_34, %c0_35, %c0_36] : memref<2x1x32xf32, #tpu.memory_space<vmem>>, vector<1x1x32xf32>
    %32 = vector.shape_cast %31 : vector<1x1x32xf32> to vector<1x32xf32>
    %33 = vector.shape_cast %32 : vector<1x32xf32> to vector<1x32xf32>
    %34 = vector.broadcast %33 : vector<1x32xf32> to vector<8x32xf32>
    %c1_37 = arith.constant 1 : index
    %c0_38 = arith.constant 0 : index
    %c0_39 = arith.constant 0 : index
    %35 = vector.load %arg1[%c1_37, %c0_38, %c0_39] : memref<4x8x32xf32, #tpu.memory_space<vmem>>, vector<1x8x32xf32>
    %36 = vector.shape_cast %35 : vector<1x8x32xf32> to vector<8x32xf32>
    %c0_i32_40 = arith.constant 0 : i32
    %c5_i32_41 = arith.constant 5 : i32
    %37 = arith.addi %c0_i32_40, %c5_i32_41 : i32
    %c1_i32_42 = arith.constant 1 : i32
    %38 = scf.for %arg22 = %c0_i32_40 to %37 step %c1_i32_42 iter_args(%arg23 = %36) -> (vector<8x32xf32>)  : i32 {
      %c4_i32 = arith.constant 4 : i32
      %104 = arith.subi %c4_i32, %arg22 : i32
      %c8_i32 = arith.constant 8 : i32
      %105 = arith.muli %104, %c8_i32 : i32
      %106 = tpu.assume_multiple %105, 8 : i32
      %107 = arith.index_cast %106 : i32 to index
      %c0_115 = arith.constant 0 : index
      %108 = vector.load %arg17[%107, %c0_115] : memref<40x96xf32, #tpu.memory_space<vmem>>, vector<8x96xf32>
      %cst_116 = arith.constant dense<0.000000e+00> : vector<8x96xf32>
      %109 = tpu.matmul %arg23, %30, %cst_116 {dimension_numbers = #tpu.dot_dimension_numbers<[1], [0], [0], [1], [0, 0, 1, 1], [], []>} : vector<8x32xf32>, vector<32x96xf32>, vector<8x96xf32> -> vector<8x96xf32>
      %110 = vector.extract_strided_slice %108 {offsets = [0, 0], sizes = [8, 64], strides = [1, 1]} : vector<8x96xf32> to vector<8x64xf32>
      %111 = vector.extract_strided_slice %109 {offsets = [0, 0], sizes = [8, 64], strides = [1, 1]} : vector<8x96xf32> to vector<8x64xf32>
      %112 = arith.addf %110, %111 : vector<8x64xf32>
      %113 = arith.negf %112 : vector<8x64xf32>
      %114 = math.exp %113 : vector<8x64xf32>
      %cst_117 = arith.constant 1.000000e+00 : f32
      %115 = vector.broadcast %cst_117 : f32 to vector<8x64xf32>
      %116 = arith.addf %115, %114 : vector<8x64xf32>
      %117 = arith.divf %115, %116 : vector<8x64xf32>
      %118 = vector.extract_strided_slice %117 {offsets = [0, 0], sizes = [8, 32], strides = [1, 1]} : vector<8x64xf32> to vector<8x32xf32>
      %119 = vector.extract_strided_slice %117 {offsets = [0, 32], sizes = [8, 32], strides = [1, 1]} : vector<8x64xf32> to vector<8x32xf32>
      %120 = vector.extract_strided_slice %108 {offsets = [0, 64], sizes = [8, 32], strides = [1, 1]} : vector<8x96xf32> to vector<8x32xf32>
      %121 = vector.extract_strided_slice %109 {offsets = [0, 64], sizes = [8, 32], strides = [1, 1]} : vector<8x96xf32> to vector<8x32xf32>
      %122 = arith.addf %121, %34 : vector<8x32xf32>
      %123 = arith.mulf %118, %122 : vector<8x32xf32>
      %124 = arith.addf %120, %123 : vector<8x32xf32>
      %125 = math.tanh %124 : vector<8x32xf32>
      %cst_118 = arith.constant 1.000000e+00 : f32
      %126 = vector.broadcast %cst_118 : f32 to vector<8x32xf32>
      %127 = arith.subf %126, %119 : vector<8x32xf32>
      %128 = arith.mulf %127, %125 : vector<8x32xf32>
      %129 = arith.mulf %119, %arg23 : vector<8x32xf32>
      %130 = arith.addf %128, %129 : vector<8x32xf32>
      %131 = arith.index_cast %106 : i32 to index
      %c0_119 = arith.constant 0 : index
      %132 = vector.load %arg19[%131, %c0_119] : memref<40x32xf32, #tpu.memory_space<vmem>>, vector<8x32xf32>
      tpu.vector_store %arg19[%131, %c0_119], %130 {strides = array<i32>} : memref<40x32xf32, #tpu.memory_space<vmem>>, vector<8x32xf32>,
      scf.yield %130 : vector<8x32xf32>
    }
    %c5_i32_43 = arith.constant 5 : i32
    %c0_44 = arith.constant 0 : index
    %c32 = arith.constant 32 : index
    %39 = vector.load %arg16[%c0_44, %c32] : memref<8x128xf32, #tpu.memory_space<vmem>>, vector<8x32xf32>
    tpu.vector_store %arg16[%c0_44, %c32], %38 {strides = array<i32>} : memref<8x128xf32, #tpu.memory_space<vmem>>, vector<8x32xf32>,
    %c0_45 = arith.constant 0 : index
    %c0_46 = arith.constant 0 : index
    %c0_47 = arith.constant 0 : index
    %40 = vector.load %arg7[%c0_45, %c0_46, %c0_47] : memref<2x64x96xf32, #tpu.memory_space<vmem>>, vector<1x64x96xf32>
    %41 = vector.shape_cast %40 : vector<1x64x96xf32> to vector<64x96xf32>
    %c0_48 = arith.constant 0 : index
    %c0_49 = arith.constant 0 : index
    %42 = vector.load %arg18[%c0_48, %c0_49] : memref<40x32xf32, #tpu.memory_space<vmem>>, vector<40x32xf32>
    %43 = vector.extract_strided_slice %41 {offsets = [0, 0], sizes = [32, 96], strides = [1, 1]} : vector<64x96xf32> to vector<32x96xf32>
    %cst_50 = arith.constant dense<0.000000e+00> : vector<40x96xf32>
    %44 = tpu.matmul %42, %43, %cst_50 {dimension_numbers = #tpu.dot_dimension_numbers<[1], [0], [0], [1], [0, 0, 1, 1], [], []>} : vector<40x32xf32>, vector<32x96xf32>, vector<40x96xf32> -> vector<40x96xf32>
    %c0_51 = arith.constant 0 : index
    %c0_52 = arith.constant 0 : index
    %45 = vector.load %arg19[%c0_51, %c0_52] : memref<40x32xf32, #tpu.memory_space<vmem>>, vector<40x32xf32>
    %46 = vector.extract_strided_slice %41 {offsets = [32, 0], sizes = [32, 96], strides = [1, 1]} : vector<64x96xf32> to vector<32x96xf32>
    %cst_53 = arith.constant dense<0.000000e+00> : vector<40x96xf32>
    %47 = tpu.matmul %45, %46, %cst_53 {dimension_numbers = #tpu.dot_dimension_numbers<[1], [0], [0], [1], [0, 0, 1, 1], [], []>} : vector<40x32xf32>, vector<32x96xf32>, vector<40x96xf32> -> vector<40x96xf32>
    %48 = arith.addf %44, %47 : vector<40x96xf32>
    %c0_54 = arith.constant 0 : index
    %c0_55 = arith.constant 0 : index
    %c0_56 = arith.constant 0 : index
    %49 = vector.load %arg9[%c0_54, %c0_55, %c0_56] : memref<2x1x96xf32, #tpu.memory_space<vmem>>, vector<1x1x96xf32>
    %50 = vector.shape_cast %49 : vector<1x1x96xf32> to vector<1x96xf32>
    %51 = vector.broadcast %50 : vector<1x96xf32> to vector<40x96xf32>
    %52 = arith.addf %48, %51 : vector<40x96xf32>
    %c0_57 = arith.constant 0 : index
    %c0_58 = arith.constant 0 : index
    %53 = vector.load %arg17[%c0_57, %c0_58] : memref<40x96xf32, #tpu.memory_space<vmem>>, vector<40x96xf32>
    tpu.vector_store %arg17[%c0_57, %c0_58], %52 {strides = array<i32>} : memref<40x96xf32, #tpu.memory_space<vmem>>, vector<40x96xf32>,
    %c0_59 = arith.constant 0 : index
    %c0_60 = arith.constant 0 : index
    %c0_61 = arith.constant 0 : index
    %54 = vector.load %arg8[%c0_59, %c0_60, %c0_61] : memref<2x32x96xf32, #tpu.memory_space<vmem>>, vector<1x32x96xf32>
    %55 = vector.shape_cast %54 : vector<1x32x96xf32> to vector<32x96xf32>
    %c0_62 = arith.constant 0 : index
    %c0_63 = arith.constant 0 : index
    %c0_64 = arith.constant 0 : index
    %56 = vector.load %arg10[%c0_62, %c0_63, %c0_64] : memref<2x1x32xf32, #tpu.memory_space<vmem>>, vector<1x1x32xf32>
    %57 = vector.shape_cast %56 : vector<1x1x32xf32> to vector<1x32xf32>
    %58 = vector.shape_cast %57 : vector<1x32xf32> to vector<1x32xf32>
    %59 = vector.broadcast %58 : vector<1x32xf32> to vector<8x32xf32>
    %c2 = arith.constant 2 : index
    %c0_65 = arith.constant 0 : index
    %c0_66 = arith.constant 0 : index
    %60 = vector.load %arg1[%c2, %c0_65, %c0_66] : memref<4x8x32xf32, #tpu.memory_space<vmem>>, vector<1x8x32xf32>
    %61 = vector.shape_cast %60 : vector<1x8x32xf32> to vector<8x32xf32>
    %cst_67 = arith.constant 0.000000e+00 : f32
    %62 = vector.broadcast %cst_67 : f32 to vector<8x32xf32>
    %c0_i32_68 = arith.constant 0 : i32
    %c5_i32_69 = arith.constant 5 : i32
    %63 = arith.addi %c0_i32_68, %c5_i32_69 : i32
    %c1_i32_70 = arith.constant 1 : i32
    %64:2 = scf.for %arg22 = %c0_i32_68 to %63 step %c1_i32_70 iter_args(%arg23 = %61, %arg24 = %62) -> (vector<8x32xf32>, vector<8x32xf32>)  : i32 {
      %c8_i32 = arith.constant 8 : i32
      %104 = arith.muli %arg22, %c8_i32 : i32
      %105 = tpu.assume_multiple %104, 8 : i32
      %106 = arith.index_cast %105 : i32 to index
      %c0_115 = arith.constant 0 : index
      %107 = vector.load %arg17[%106, %c0_115] : memref<40x96xf32, #tpu.memory_space<vmem>>, vector<8x96xf32>
      %cst_116 = arith.constant dense<0.000000e+00> : vector<8x96xf32>
      %108 = tpu.matmul %arg23, %55, %cst_116 {dimension_numbers = #tpu.dot_dimension_numbers<[1], [0], [0], [1], [0, 0, 1, 1], [], []>} : vector<8x32xf32>, vector<32x96xf32>, vector<8x96xf32> -> vector<8x96xf32>
      %109 = vector.extract_strided_slice %107 {offsets = [0, 0], sizes = [8, 64], strides = [1, 1]} : vector<8x96xf32> to vector<8x64xf32>
      %110 = vector.extract_strided_slice %108 {offsets = [0, 0], sizes = [8, 64], strides = [1, 1]} : vector<8x96xf32> to vector<8x64xf32>
      %111 = arith.addf %109, %110 : vector<8x64xf32>
      %112 = arith.negf %111 : vector<8x64xf32>
      %113 = math.exp %112 : vector<8x64xf32>
      %cst_117 = arith.constant 1.000000e+00 : f32
      %114 = vector.broadcast %cst_117 : f32 to vector<8x64xf32>
      %115 = arith.addf %114, %113 : vector<8x64xf32>
      %116 = arith.divf %114, %115 : vector<8x64xf32>
      %117 = vector.extract_strided_slice %116 {offsets = [0, 0], sizes = [8, 32], strides = [1, 1]} : vector<8x64xf32> to vector<8x32xf32>
      %118 = vector.extract_strided_slice %116 {offsets = [0, 32], sizes = [8, 32], strides = [1, 1]} : vector<8x64xf32> to vector<8x32xf32>
      %119 = vector.extract_strided_slice %107 {offsets = [0, 64], sizes = [8, 32], strides = [1, 1]} : vector<8x96xf32> to vector<8x32xf32>
      %120 = vector.extract_strided_slice %108 {offsets = [0, 64], sizes = [8, 32], strides = [1, 1]} : vector<8x96xf32> to vector<8x32xf32>
      %121 = arith.addf %120, %59 : vector<8x32xf32>
      %122 = arith.mulf %117, %121 : vector<8x32xf32>
      %123 = arith.addf %119, %122 : vector<8x32xf32>
      %124 = math.tanh %123 : vector<8x32xf32>
      %cst_118 = arith.constant 1.000000e+00 : f32
      %125 = vector.broadcast %cst_118 : f32 to vector<8x32xf32>
      %126 = arith.subf %125, %118 : vector<8x32xf32>
      %127 = arith.mulf %126, %124 : vector<8x32xf32>
      %128 = arith.mulf %118, %arg23 : vector<8x32xf32>
      %129 = arith.addf %127, %128 : vector<8x32xf32>
      %c0_i32_119 = arith.constant 0 : i32
      %130 = arith.cmpi eq, %arg22, %c0_i32_119 : i32
      %131 = arith.select %130, %129, %arg24 : vector<8x32xf32>
      scf.yield %129, %131 : vector<8x32xf32>, vector<8x32xf32>
    }
    %c5_i32_71 = arith.constant 5 : i32
    %c0_72 = arith.constant 0 : index
    %c64 = arith.constant 64 : index
    %65 = vector.load %arg16[%c0_72, %c64] : memref<8x128xf32, #tpu.memory_space<vmem>>, vector<8x32xf32>
    tpu.vector_store %arg16[%c0_72, %c64], %64#0 {strides = array<i32>} : memref<8x128xf32, #tpu.memory_space<vmem>>, vector<8x32xf32>,
    %c1_73 = arith.constant 1 : index
    %c0_74 = arith.constant 0 : index
    %c0_75 = arith.constant 0 : index
    %66 = vector.load %arg7[%c1_73, %c0_74, %c0_75] : memref<2x64x96xf32, #tpu.memory_space<vmem>>, vector<1x64x96xf32>
    %67 = vector.shape_cast %66 : vector<1x64x96xf32> to vector<64x96xf32>
    %c0_76 = arith.constant 0 : index
    %c0_77 = arith.constant 0 : index
    %68 = vector.load %arg18[%c0_76, %c0_77] : memref<40x32xf32, #tpu.memory_space<vmem>>, vector<40x32xf32>
    %69 = vector.extract_strided_slice %67 {offsets = [0, 0], sizes = [32, 96], strides = [1, 1]} : vector<64x96xf32> to vector<32x96xf32>
    %cst_78 = arith.constant dense<0.000000e+00> : vector<40x96xf32>
    %70 = tpu.matmul %68, %69, %cst_78 {dimension_numbers = #tpu.dot_dimension_numbers<[1], [0], [0], [1], [0, 0, 1, 1], [], []>} : vector<40x32xf32>, vector<32x96xf32>, vector<40x96xf32> -> vector<40x96xf32>
    %c0_79 = arith.constant 0 : index
    %c0_80 = arith.constant 0 : index
    %71 = vector.load %arg19[%c0_79, %c0_80] : memref<40x32xf32, #tpu.memory_space<vmem>>, vector<40x32xf32>
    %72 = vector.extract_strided_slice %67 {offsets = [32, 0], sizes = [32, 96], strides = [1, 1]} : vector<64x96xf32> to vector<32x96xf32>
    %cst_81 = arith.constant dense<0.000000e+00> : vector<40x96xf32>
    %73 = tpu.matmul %71, %72, %cst_81 {dimension_numbers = #tpu.dot_dimension_numbers<[1], [0], [0], [1], [0, 0, 1, 1], [], []>} : vector<40x32xf32>, vector<32x96xf32>, vector<40x96xf32> -> vector<40x96xf32>
    %74 = arith.addf %70, %73 : vector<40x96xf32>
    %c1_82 = arith.constant 1 : index
    %c0_83 = arith.constant 0 : index
    %c0_84 = arith.constant 0 : index
    %75 = vector.load %arg9[%c1_82, %c0_83, %c0_84] : memref<2x1x96xf32, #tpu.memory_space<vmem>>, vector<1x1x96xf32>
    %76 = vector.shape_cast %75 : vector<1x1x96xf32> to vector<1x96xf32>
    %77 = vector.broadcast %76 : vector<1x96xf32> to vector<40x96xf32>
    %78 = arith.addf %74, %77 : vector<40x96xf32>
    %c0_85 = arith.constant 0 : index
    %c0_86 = arith.constant 0 : index
    %79 = vector.load %arg17[%c0_85, %c0_86] : memref<40x96xf32, #tpu.memory_space<vmem>>, vector<40x96xf32>
    tpu.vector_store %arg17[%c0_85, %c0_86], %78 {strides = array<i32>} : memref<40x96xf32, #tpu.memory_space<vmem>>, vector<40x96xf32>,
    %c1_87 = arith.constant 1 : index
    %c0_88 = arith.constant 0 : index
    %c0_89 = arith.constant 0 : index
    %80 = vector.load %arg8[%c1_87, %c0_88, %c0_89] : memref<2x32x96xf32, #tpu.memory_space<vmem>>, vector<1x32x96xf32>
    %81 = vector.shape_cast %80 : vector<1x32x96xf32> to vector<32x96xf32>
    %c1_90 = arith.constant 1 : index
    %c0_91 = arith.constant 0 : index
    %c0_92 = arith.constant 0 : index
    %82 = vector.load %arg10[%c1_90, %c0_91, %c0_92] : memref<2x1x32xf32, #tpu.memory_space<vmem>>, vector<1x1x32xf32>
    %83 = vector.shape_cast %82 : vector<1x1x32xf32> to vector<1x32xf32>
    %84 = vector.shape_cast %83 : vector<1x32xf32> to vector<1x32xf32>
    %85 = vector.broadcast %84 : vector<1x32xf32> to vector<8x32xf32>
    %c3 = arith.constant 3 : index
    %c0_93 = arith.constant 0 : index
    %c0_94 = arith.constant 0 : index
    %86 = vector.load %arg1[%c3, %c0_93, %c0_94] : memref<4x8x32xf32, #tpu.memory_space<vmem>>, vector<1x8x32xf32>
    %87 = vector.shape_cast %86 : vector<1x8x32xf32> to vector<8x32xf32>
    %c0_i32_95 = arith.constant 0 : i32
    %c5_i32_96 = arith.constant 5 : i32
    %88 = arith.addi %c0_i32_95, %c5_i32_96 : i32
    %c1_i32_97 = arith.constant 1 : i32
    %89 = scf.for %arg22 = %c0_i32_95 to %88 step %c1_i32_97 iter_args(%arg23 = %87) -> (vector<8x32xf32>)  : i32 {
      %c4_i32 = arith.constant 4 : i32
      %104 = arith.subi %c4_i32, %arg22 : i32
      %c8_i32 = arith.constant 8 : i32
      %105 = arith.muli %104, %c8_i32 : i32
      %106 = tpu.assume_multiple %105, 8 : i32
      %107 = arith.index_cast %106 : i32 to index
      %c0_115 = arith.constant 0 : index
      %108 = vector.load %arg17[%107, %c0_115] : memref<40x96xf32, #tpu.memory_space<vmem>>, vector<8x96xf32>
      %cst_116 = arith.constant dense<0.000000e+00> : vector<8x96xf32>
      %109 = tpu.matmul %arg23, %81, %cst_116 {dimension_numbers = #tpu.dot_dimension_numbers<[1], [0], [0], [1], [0, 0, 1, 1], [], []>} : vector<8x32xf32>, vector<32x96xf32>, vector<8x96xf32> -> vector<8x96xf32>
      %110 = vector.extract_strided_slice %108 {offsets = [0, 0], sizes = [8, 64], strides = [1, 1]} : vector<8x96xf32> to vector<8x64xf32>
      %111 = vector.extract_strided_slice %109 {offsets = [0, 0], sizes = [8, 64], strides = [1, 1]} : vector<8x96xf32> to vector<8x64xf32>
      %112 = arith.addf %110, %111 : vector<8x64xf32>
      %113 = arith.negf %112 : vector<8x64xf32>
      %114 = math.exp %113 : vector<8x64xf32>
      %cst_117 = arith.constant 1.000000e+00 : f32
      %115 = vector.broadcast %cst_117 : f32 to vector<8x64xf32>
      %116 = arith.addf %115, %114 : vector<8x64xf32>
      %117 = arith.divf %115, %116 : vector<8x64xf32>
      %118 = vector.extract_strided_slice %117 {offsets = [0, 0], sizes = [8, 32], strides = [1, 1]} : vector<8x64xf32> to vector<8x32xf32>
      %119 = vector.extract_strided_slice %117 {offsets = [0, 32], sizes = [8, 32], strides = [1, 1]} : vector<8x64xf32> to vector<8x32xf32>
      %120 = vector.extract_strided_slice %108 {offsets = [0, 64], sizes = [8, 32], strides = [1, 1]} : vector<8x96xf32> to vector<8x32xf32>
      %121 = vector.extract_strided_slice %109 {offsets = [0, 64], sizes = [8, 32], strides = [1, 1]} : vector<8x96xf32> to vector<8x32xf32>
      %122 = arith.addf %121, %85 : vector<8x32xf32>
      %123 = arith.mulf %118, %122 : vector<8x32xf32>
      %124 = arith.addf %120, %123 : vector<8x32xf32>
      %125 = math.tanh %124 : vector<8x32xf32>
      %cst_118 = arith.constant 1.000000e+00 : f32
      %126 = vector.broadcast %cst_118 : f32 to vector<8x32xf32>
      %127 = arith.subf %126, %119 : vector<8x32xf32>
      %128 = arith.mulf %127, %125 : vector<8x32xf32>
      %129 = arith.mulf %119, %arg23 : vector<8x32xf32>
      %130 = arith.addf %128, %129 : vector<8x32xf32>
      scf.yield %130 : vector<8x32xf32>
    }
    %c5_i32_98 = arith.constant 5 : i32
    %c0_99 = arith.constant 0 : index
    %c96 = arith.constant 96 : index
    %90 = vector.load %arg16[%c0_99, %c96] : memref<8x128xf32, #tpu.memory_space<vmem>>, vector<8x32xf32>
    tpu.vector_store %arg16[%c0_99, %c96], %89 {strides = array<i32>} : memref<8x128xf32, #tpu.memory_space<vmem>>, vector<8x32xf32>,
    %c0_100 = arith.constant 0 : index
    %c0_101 = arith.constant 0 : index
    %91 = vector.load %arg11[%c0_100, %c0_101] : memref<32x128xf32, #tpu.memory_space<vmem>>, vector<32x128xf32>
    %cst_102 = arith.constant dense<0.000000e+00> : vector<8x128xf32>
    %92 = tpu.matmul %64#1, %91, %cst_102 {dimension_numbers = #tpu.dot_dimension_numbers<[1], [0], [0], [1], [0, 0, 1, 1], [], []>} : vector<8x32xf32>, vector<32x128xf32>, vector<8x128xf32> -> vector<8x128xf32>
    %c0_103 = arith.constant 0 : index
    %c0_104 = arith.constant 0 : index
    %93 = vector.load %arg12[%c0_103, %c0_104] : memref<32x128xf32, #tpu.memory_space<vmem>>, vector<32x128xf32>
    %cst_105 = arith.constant dense<0.000000e+00> : vector<8x128xf32>
    %94 = tpu.matmul %89, %93, %cst_105 {dimension_numbers = #tpu.dot_dimension_numbers<[1], [0], [0], [1], [0, 0, 1, 1], [], []>} : vector<8x32xf32>, vector<32x128xf32>, vector<8x128xf32> -> vector<8x128xf32>
    %95 = arith.addf %92, %94 : vector<8x128xf32>
    %c0_106 = arith.constant 0 : index
    %c0_107 = arith.constant 0 : index
    %96 = vector.load %arg2[%c0_106, %c0_107] : memref<8x8xf32, #tpu.memory_space<vmem>>, vector<8x8xf32>
    %c0_108 = arith.constant 0 : index
    %c0_109 = arith.constant 0 : index
    %97 = vector.load %arg13[%c0_108, %c0_109] : memref<8x128xf32, #tpu.memory_space<vmem>>, vector<8x128xf32>
    %cst_110 = arith.constant dense<0.000000e+00> : vector<8x128xf32>
    %98 = tpu.matmul %96, %97, %cst_110 {dimension_numbers = #tpu.dot_dimension_numbers<[1], [0], [0], [1], [0, 0, 1, 1], [], []>} : vector<8x8xf32>, vector<8x128xf32>, vector<8x128xf32> -> vector<8x128xf32>
    %99 = arith.addf %95, %98 : vector<8x128xf32>
    %c0_111 = arith.constant 0 : index
    %c0_112 = arith.constant 0 : index
    %100 = vector.load %arg14[%c0_111, %c0_112] : memref<1x128xf32, #tpu.memory_space<vmem>>, vector<1x128xf32>
    %101 = vector.broadcast %100 : vector<1x128xf32> to vector<8x128xf32>
    %102 = arith.addf %99, %101 : vector<8x128xf32>
    %c0_113 = arith.constant 0 : index
    %c0_114 = arith.constant 0 : index
    %103 = vector.load %arg15[%c0_113, %c0_114] : memref<8x128xf32, #tpu.memory_space<vmem>>, vector<8x128xf32>
    tpu.vector_store %arg15[%c0_113, %c0_114], %102 {strides = array<i32>} : memref<8x128xf32, #tpu.memory_space<vmem>>, vector<8x128xf32>,
    return
  }
}

</mosaic_0001>

<llo_original>
// kernel: decoder_rnn_forward.1
$region0: #{decoder_rnn_forward.1}
  #allocation0 [shape = 'u32[]', space=smem, size = 0x4, offset = 0x4, fixed_abs, tag = 'smem constant byte address 0x4 - core index']
  #allocation1 [shape = 'u32[144,128]{1,0:T(1,128)}', space=vmem, size = 0x12000, scoped, tag = 'internal scratch']
  #allocation2 [shape = 'f32[40,96]{1,0:T(8,128)}', space=vmem, size = 0x5000, scoped, tag = 'scratch operand']
  #allocation3 [shape = 'f32[40,32]{1,0:T(8,128)}', space=vmem, size = 0x5000, scoped, tag = 'scratch operand']
  #allocation4 [shape = 'f32[40,32]{1,0:T(8,128)}', space=vmem, size = 0x5000, scoped, tag = 'scratch operand']
  #allocation5 [shape = 'f32[40,32]{1,0:T(8,128)}', space=vmem, size = 0x5000, scoped, tag = 'scratch operand']
  #allocation6 [shape = 'f32[40,32]{1,0:T(8,128)}', space=vmem, size = 0x5000, scoped, tag = 'scratch operand']
  %s0 = inlined_call_operand.vmem [shape: f32[40,16], index: 0, kind: input, shape index: {}]
  %s1 = inlined_call_operand.vmem [shape: f32[4,8,32], index: 1, kind: input, shape index: {}]
  %s2 = inlined_call_operand.vmem [shape: f32[8,8], index: 2, kind: input, shape index: {}]
  %s3 = inlined_call_operand.vmem [shape: f32[2,16,96], index: 3, kind: input, shape index: {}]
  %s4 = inlined_call_operand.vmem [shape: f32[2,32,96], index: 4, kind: input, shape index: {}]
  %s5 = inlined_call_operand.hbm [shape: f32[2,1,96], index: 5, kind: input, shape index: {}]
  %s6 = inlined_call_operand.hbm [shape: f32[2,1,32], index: 6, kind: input, shape index: {}]
  %s7 = inlined_call_operand.hbm [shape: f32[2,64,96], index: 7, kind: input, shape index: {}]
  %s8 = inlined_call_operand.hbm [shape: f32[2,32,96], index: 8, kind: input, shape index: {}]
  %s9 = inlined_call_operand.hbm [shape: f32[2,1,96], index: 9, kind: input, shape index: {}]
  %s10 = inlined_call_operand.hbm [shape: f32[2,1,32], index: 10, kind: input, shape index: {}]
  %s11 = inlined_call_operand.vmem [shape: f32[32,128], index: 11, kind: input, shape index: {}]
  %s12 = inlined_call_operand.hbm [shape: f32[32,128], index: 12, kind: input, shape index: {}]
  %s13 = inlined_call_operand.hbm [shape: f32[8,128], index: 13, kind: input, shape index: {}]
  %s14 = inlined_call_operand.hbm [shape: f32[1,128], index: 14, kind: input, shape index: {}]
  %s15 = inlined_call_operand.vmem [shape: f32[8,128], index: 15, kind: output, shape index: {0}]
  %s16 = inlined_call_operand.vmem [shape: f32[8,128], index: 16, kind: output, shape index: {1}]
  %17 = xla_tuple %s15, %s16
  %s18 = sld [smem:[#allocation0]]
  $region142: #{decoder_rnn_forward.1} parent=0
    _
  %s20 = ssub.s32 1, %s18
  %s21 = scalar_select 0, %s20, %s18
  $region1: #{decoder_rnn_forward.1} parent=0
    #allocation7 [shape = 'u8[1024]{0}', space=vmem, size = 0x400, scoped, tag = 'input window, operand 5, single buffered']
    #allocation8 [shape = 's32[1]{0}', space=sflag, size = 0x4, scoped, tag = 'scoped memory for decoder_rnn_forward.1']
    #allocation9 [shape = 'u8[1024]{0}', space=vmem, size = 0x400, scoped, tag = 'input window, operand 6, single buffered']
    #allocation10 [shape = 's32[1]{0}', space=sflag, size = 0x4, scoped, tag = 'scoped memory for decoder_rnn_forward.1']
    #allocation11 [shape = 'u8[65536]{0}', space=vmem, size = 0x10000, scoped, tag = 'input window, operand 7, single buffered']
    #allocation12 [shape = 'u8[32768]{0}', space=vmem, size = 0x8000, scoped, tag = 'input window, operand 8, single buffered']
    #allocation13 [shape = 's32[1]{0}', space=sflag, size = 0x4, scoped, tag = 'scoped memory for decoder_rnn_forward.1']
    #allocation14 [shape = 'u8[1024]{0}', space=vmem, size = 0x400, scoped, tag = 'input window, operand 9, single buffered']
    #allocation15 [shape = 'u8[1024]{0}', space=vmem, size = 0x400, scoped, tag = 'input window, operand 10, single buffered']
    #allocation16 [shape = 's32[1]{0}', space=sflag, size = 0x4, scoped, tag = 'scoped memory for decoder_rnn_forward.1']
    #allocation17 [shape = 'u8[16384]{0}', space=vmem, size = 0x4000, scoped, tag = 'input window, operand 12, single buffered']
    #allocation18 [shape = 'u8[4096]{0}', space=vmem, size = 0x1000, scoped, tag = 'input window, operand 13, single buffered']
    #allocation19 [shape = 's32[1]{0}', space=sflag, size = 0x4, scoped, tag = 'scoped memory for decoder_rnn_forward.1']
    #allocation20 [shape = 'u8[512]{0}', space=vmem, size = 0x400, scoped, tag = 'input window, operand 14, single buffered']
    %22 = vsyncpa [#allocation8], 0
    %23 = vsyncpa [#allocation10], 0
    %24 = vsyncpa [#allocation13], 0
    %25 = vsyncpa [#allocation16], 0
    %26 = vsyncpa [#allocation19], 0
    // Predicated region
    $region2: #{decoder_rnn_forward.1} parent=1 // pred_check
      _
    $region3: #{decoder_rnn_forward.1} parent=1 // pred_check_branch
      %28 = sbr.rel (0) target = $region5
    $region4: #{decoder_rnn_forward.1} parent=1 // pred_region
      _
    $region5: #{decoder_rnn_forward.1} parent=1 // pred_fallthru
      _
    // Predicated region
    $region6: #{decoder_rnn_forward.1} parent=1 // pred_check
      _
    $region7: #{decoder_rnn_forward.1} parent=1 // pred_check_branch
      %30 = sbr.rel (0) target = $region9
    $region8: #{decoder_rnn_forward.1} parent=1 // pred_region
      _
    $region9: #{decoder_rnn_forward.1} parent=1 // pred_fallthru
      _
    // Predicated region
    $region10: #{decoder_rnn_forward.1} parent=1 // pred_check
      _
    $region11: #{decoder_rnn_forward.1} parent=1 // pred_check_branch
      %32 = sbr.rel (0) target = $region13
    $region12: #{decoder_rnn_forward.1} parent=1 // pred_region
      _
    $region13: #{decoder_rnn_forward.1} parent=1 // pred_fallthru
      _
    // Predicated region
    $region14: #{decoder_rnn_forward.1} parent=1 // pred_check
      _
    $region15: #{decoder_rnn_forward.1} parent=1 // pred_check_branch
      %34 = sbr.rel (0) target = $region17
    $region16: #{decoder_rnn_forward.1} parent=1 // pred_region
      _
    $region17: #{decoder_rnn_forward.1} parent=1 // pred_fallthru
      _
    // Predicated region
    $region18: #{decoder_rnn_forward.1} parent=1 // pred_check
      _
    $region19: #{decoder_rnn_forward.1} parent=1 // pred_check_branch
      %36 = sbr.rel (0) target = $region21
    $region20: #{decoder_rnn_forward.1} parent=1 // pred_region
      _
    $region21: #{decoder_rnn_forward.1} parent=1 // pred_fallthru
      _
    // Predicated region
    $region22: #{decoder_rnn_forward.1} parent=1 // pred_check
      _
    $region23: #{decoder_rnn_forward.1} parent=1 // pred_check_branch
      %38 = sbr.rel (0) target = $region25
    $region24: #{decoder_rnn_forward.1} parent=1 // pred_region
      %s40 = ssub.s32 32, 32
      %41 = vsyncadd [#allocation8], %s40
      %s42 = sshll.u32 [#allocation7], 4
      %s43 = int_to_ptr.vmem [resolvable:$true] %s42
      %48 = dma.hbm_to_vmem [thread:$0]  %s5, 32, %s43, [#allocation8], 16, 16, 1
    $region25: #{decoder_rnn_forward.1} parent=1 // pred_fallthru
      _
    // Predicated region
    $region26: #{decoder_rnn_forward.1} parent=1 // pred_check
      _
    $region27: #{decoder_rnn_forward.1} parent=1 // pred_check_branch
      %50 = sbr.rel (0) target = $region29
    $region28: #{decoder_rnn_forward.1} parent=1 // pred_region
      %s52 = ssub.s32 32, 32
      %53 = vsyncadd [#allocation10], %s52
      %s54 = sshll.u32 [#allocation9], 4
      %s55 = int_to_ptr.vmem [resolvable:$true] %s54
      %60 = dma.hbm_to_vmem [thread:$0]  %s6, 32, %s55, [#allocation10], 16, 16, 1
    $region29: #{decoder_rnn_forward.1} parent=1 // pred_fallthru
      _
    // Predicated region
    $region30: #{decoder_rnn_forward.1} parent=1 // pred_check
      _
    $region31: #{decoder_rnn_forward.1} parent=1 // pred_check_branch
      %62 = sbr.rel (0) target = $region33
    $region32: #{decoder_rnn_forward.1} parent=1 // pred_region
      %s64 = ssub.s32 2048, 2048
      %65 = vsyncadd [#allocation10], %s64
      %s66 = sshll.u32 [#allocation11], 4
      %s67 = int_to_ptr.vmem [resolvable:$true] %s66
      %72 = dma.hbm_to_vmem [thread:$0]  %s7, 2048, %s67, [#allocation10], 128, 128, 8
    $region33: #{decoder_rnn_forward.1} parent=1 // pred_fallthru
      _
    // Predicated region
    $region34: #{decoder_rnn_forward.1} parent=1 // pred_check
      _
    $region35: #{decoder_rnn_forward.1} parent=1 // pred_check_branch
      %74 = sbr.rel (0) target = $region37
    $region36: #{decoder_rnn_forward.1} parent=1 // pred_region
      %s76 = ssub.s32 1024, 1024
      %77 = vsyncadd [#allocation13], %s76
      %s78 = sshll.u32 [#allocation12], 4
      %s79 = int_to_ptr.vmem [resolvable:$true] %s78
      %84 = dma.hbm_to_vmem [thread:$0]  %s8, 1024, %s79, [#allocation13], 128, 128, 8
    $region37: #{decoder_rnn_forward.1} parent=1 // pred_fallthru
      _
    // Predicated region
    $region38: #{decoder_rnn_forward.1} parent=1 // pred_check
      _
    $region39: #{decoder_rnn_forward.1} parent=1 // pred_check_branch
      %86 = sbr.rel (0) target = $region41
    $region40: #{decoder_rnn_forward.1} parent=1 // pred_region
      %s88 = ssub.s32 32, 32
      %89 = vsyncadd [#allocation13], %s88
      %s90 = sshll.u32 [#allocation14], 4
      %s91 = int_to_ptr.vmem [resolvable:$true] %s90
      %96 = dma.hbm_to_vmem [thread:$0]  %s9, 32, %s91, [#allocation13], 16, 16, 1
    $region41: #{decoder_rnn_forward.1} parent=1 // pred_fallthru
      _
    // Predicated region
    $region42: #{decoder_rnn_forward.1} parent=1 // pred_check
      _
    $region43: #{decoder_rnn_forward.1} parent=1 // pred_check_branch
      %98 = sbr.rel (0) target = $region45
    $region44: #{decoder_rnn_forward.1} parent=1 // pred_region
      %s100 = ssub.s32 32, 32
      %101 = vsyncadd [#allocation16], %s100
      %s102 = sshll.u32 [#allocation15], 4
      %s103 = int_to_ptr.vmem [resolvable:$true] %s102
      %108 = dma.hbm_to_vmem [thread:$0]  %s10, 32, %s103, [#allocation16], 16, 16, 1
    $region45: #{decoder_rnn_forward.1} parent=1 // pred_fallthru
      _
    // Predicated region
    $region46: #{decoder_rnn_forward.1} parent=1 // pred_check
      _
    $region47: #{decoder_rnn_forward.1} parent=1 // pred_check_branch
      %110 = sbr.rel (0) target = $region49
    $region48: #{decoder_rnn_forward.1} parent=1 // pred_region
      _
    $region49: #{decoder_rnn_forward.1} parent=1 // pred_fallthru
      _
    // Predicated region
    $region50: #{decoder_rnn_forward.1} parent=1 // pred_check
      _
    $region51: #{decoder_rnn_forward.1} parent=1 // pred_check_branch
      %112 = sbr.rel (0) target = $region53
    $region52: #{decoder_rnn_forward.1} parent=1 // pred_region
      %s114 = ssub.s32 512, 512
      %115 = vsyncadd [#allocation16], %s114
      %s116 = sshll.u32 [#allocation17], 4
      %s117 = int_to_ptr.vmem [resolvable:$true] %s116
      %122 = dma.hbm_to_vmem [thread:$0]  %s12, 512, %s117, [#allocation16], 128, 128, 8
    $region53: #{decoder_rnn_forward.1} parent=1 // pred_fallthru
      _
    // Predicated region
    $region54: #{decoder_rnn_forward.1} parent=1 // pred_check
      _
    $region55: #{decoder_rnn_forward.1} parent=1 // pred_check_branch
      %124 = sbr.rel (0) target = $region57
    $region56: #{decoder_rnn_forward.1} parent=1 // pred_region
      %s126 = ssub.s32 128, 128
      %127 = vsyncadd [#allocation19], %s126
      %s129 = sshll.u32 [#allocation18], 4
      %s130 = int_to_ptr.vmem [resolvable:$true] %s129
      %132 = dma.hbm_to_vmem [thread:$0]  %s13, 128, %s130, [#allocation19]
    $region57: #{decoder_rnn_forward.1} parent=1 // pred_fallthru
      _
    // Predicated region
    $region58: #{decoder_rnn_forward.1} parent=1 // pred_check
      _
    $region59: #{decoder_rnn_forward.1} parent=1 // pred_check_branch
      %134 = sbr.rel (0) target = $region61
    $region60: #{decoder_rnn_forward.1} parent=1 // pred_region
      %s136 = ssub.s32 16, 16
      %137 = vsyncadd [#allocation19], %s136
      %s139 = sshll.u32 [#allocation20], 4
      %s140 = int_to_ptr.vmem [resolvable:$true] %s139
      %142 = dma.hbm_to_vmem [thread:$0]  %s14, 16, %s140, [#allocation19]
    $region61: #{decoder_rnn_forward.1} parent=1 // pred_fallthru
      _
    // Predicated region
    $region62: #{decoder_rnn_forward.1} parent=1 // pred_check
      _
    $region63: #{decoder_rnn_forward.1} parent=1 // pred_check_branch
      %144 = sbr.rel (0) target = $region65
    $region64: #{decoder_rnn_forward.1} parent=1 // pred_region
      %145 = dma.done [#allocation8], 32
    $region65: #{decoder_rnn_forward.1} parent=1 // pred_fallthru
      _
    // Predicated region
    $region66: #{decoder_rnn_forward.1} parent=1 // pred_check
      _
    $region67: #{decoder_rnn_forward.1} parent=1 // pred_check_branch
      %147 = sbr.rel (0) target = $region69
    $region68: #{decoder_rnn_forward.1} parent=1 // pred_region
      %148 = dma.done [#allocation10], 32
    $region69: #{decoder_rnn_forward.1} parent=1 // pred_fallthru
      _
    // Predicated region
    $region70: #{decoder_rnn_forward.1} parent=1 // pred_check
      _
    $region71: #{decoder_rnn_forward.1} parent=1 // pred_check_branch
      %150 = sbr.rel (0) target = $region73
    $region72: #{decoder_rnn_forward.1} parent=1 // pred_region
      %151 = dma.done [#allocation10], 2048
    $region73: #{decoder_rnn_forward.1} parent=1 // pred_fallthru
      _
    // Predicated region
    $region74: #{decoder_rnn_forward.1} parent=1 // pred_check
      _
    $region75: #{decoder_rnn_forward.1} parent=1 // pred_check_branch
      %153 = sbr.rel (0) target = $region77
    $region76: #{decoder_rnn_forward.1} parent=1 // pred_region
      %154 = dma.done [#allocation13], 1024
    $region77: #{decoder_rnn_forward.1} parent=1 // pred_fallthru
      _
    // Predicated region
    $region78: #{decoder_rnn_forward.1} parent=1 // pred_check
      _
    $region79: #{decoder_rnn_forward.1} parent=1 // pred_check_branch
      %156 = sbr.rel (0) target = $region81
    $region80: #{decoder_rnn_forward.1} parent=1 // pred_region
      %157 = dma.done [#allocation13], 32
    $region81: #{decoder_rnn_forward.1} parent=1 // pred_fallthru
      _
    // Predicated region
    $region82: #{decoder_rnn_forward.1} parent=1 // pred_check
      _
    $region83: #{decoder_rnn_forward.1} parent=1 // pred_check_branch
      %159 = sbr.rel (0) target = $region85
    $region84: #{decoder_rnn_forward.1} parent=1 // pred_region
      %160 = dma.done [#allocation16], 32
    $region85: #{decoder_rnn_forward.1} parent=1 // pred_fallthru
      _
    // Predicated region
    $region86: #{decoder_rnn_forward.1} parent=1 // pred_check
      _
    $region87: #{decoder_rnn_forward.1} parent=1 // pred_check_branch
      %162 = sbr.rel (0) target = $region89
    $region88: #{decoder_rnn_forward.1} parent=1 // pred_region
      %163 = dma.done [#allocation16], 512
    $region89: #{decoder_rnn_forward.1} parent=1 // pred_fallthru
      _
    // Predicated region
    $region90: #{decoder_rnn_forward.1} parent=1 // pred_check
      _
    $region91: #{decoder_rnn_forward.1} parent=1 // pred_check_branch
      %165 = sbr.rel (0) target = $region93
    $region92: #{decoder_rnn_forward.1} parent=1 // pred_region
      %166 = dma.done [#allocation19], 128
    $region93: #{decoder_rnn_forward.1} parent=1 // pred_fallthru
      _
    // Predicated region
    $region94: #{decoder_rnn_forward.1} parent=1 // pred_check
      _
    $region95: #{decoder_rnn_forward.1} parent=1 // pred_check_branch
      %168 = sbr.rel (0) target = $region97
    $region96: #{decoder_rnn_forward.1} parent=1 // pred_region
      %169 = dma.done [#allocation19], 16
    $region97: #{decoder_rnn_forward.1} parent=1 // pred_fallthru
      _
    %v170 = vld [vmem:[%s3] sm:$0xff]
    %v171 = vld [vmem:[%s3 + $0x8] sm:$0xff]
    %v172 = vld [vmem:[%s0] sm:$0xff]
    %v173 = vld [vmem:[%s0 + $0x8] sm:$0xff]
    %v174 = vld [vmem:[%s0 + $0x10] sm:$0xff]
    %v175 = vld [vmem:[%s0 + $0x18] sm:$0xff]
    %v176 = vld [vmem:[%s0 + $0x20] sm:$0xff]
    %v177 = vld [vmem:[#allocation7] sm:$0x1]
    %v179 = vlaneseq
    %v180 = vshrl.u32 %v179, 7
    %v181 = vsub.s32 0, %v180
    %v182 = vrot.slane %v177, %v181
    %vm184 = vcmask 130048
    %v186 = vsel %vm184, %v172, 0
    %v189 = vsel %vm184, %v173, 0
    %v192 = vsel %vm184, %v174, 0
    %v195 = vsel %vm184, %v175, 0
    %v198 = vsel %vm184, %v176, 0
    %200 = vmatprep.subr.mxu0 0.0
    %201 = vmatpush1.msra.mxu0 %v170
    %202 = vmatprep.subr.mxu0 0.0
    %203 = vmatpush1.msra.mxu0 %v171
    %204 = vmatprep.subr.mxu0 0.0
    %205 = vmatpush1.msra.mxu0 0.0
    %206 = vmatprep.subr.mxu0 0.0
    %207 = vmatpush1.msra.mxu0 0.0
    %208 = vmatprep.subr.mxu0 0.0
    %209 = vmatpush1.msra.mxu0 0.0
    %210 = vmatprep.subr.mxu0 0.0
    %211 = vmatpush1.msra.mxu0 0.0
    %212 = vmatprep.subr.mxu0 0.0
    %213 = vmatpush1.msra.mxu0 0.0
    %214 = vmatprep.subr.mxu0 0.0
    %215 = vmatpush1.msra.mxu0 0.0
    %216 = vmatprep.subr.mxu0 0.0
    %217 = vmatpush1.msra.mxu0 0.0
    %218 = vmatprep.subr.mxu0 0.0
    %219 = vmatpush1.msra.mxu0 0.0
    %220 = vmatprep.subr.mxu0 0.0
    %221 = vmatpush1.msra.mxu0 0.0
    %222 = vmatprep.subr.mxu0 0.0
    %223 = vmatpush1.msra.mxu0 0.0
    %224 = vmatprep.subr.mxu0 0.0
    %225 = vmatpush1.msra.mxu0 0.0
    %226 = vmatprep.subr.mxu0 0.0
    %227 = vmatpush1.msra.mxu0 0.0
    %228 = vmatprep.subr.mxu0 0.0
    %229 = vmatpush1.msra.mxu0 0.0
    %230 = vmatprep.subr.mxu0 0.0
    %231 = vmatpush1.msra.mxu0 0.0
    %232 = vmatprep.subr.mxu0 0.0
    %233 = vmatpush1.msra.mxu0 0.0
    %234 = vmatprep.subr.mxu0 0.0
    %235 = vmatpush1.msra.mxu0 0.0
    %236 = vmatprep.subr.mxu0 0.0
    %237 = vmatpush1.msra.mxu0 0.0
    %238 = vmatprep.subr.mxu0 0.0
    %239 = vmatpush1.msra.mxu0 0.0
    %240 = vmatprep.subr.mxu0 0.0
    %241 = vmatpush1.msra.mxu0 0.0
    %242 = vmatprep.subr.mxu0 0.0
    %243 = vmatpush1.msra.mxu0 0.0
    %244 = vmatprep.subr.mxu0 0.0
    %245 = vmatpush1.msra.mxu0 0.0
    %246 = vmatprep.subr.mxu0 0.0
    %247 = vmatpush1.msra.mxu0 0.0
    %248 = vmatprep.subr.mxu0 0.0
    %249 = vmatpush1.msra.mxu0 0.0
    %250 = vmatprep.subr.mxu0 0.0
    %251 = vmatpush1.msra.mxu0 0.0
    %252 = vmatprep.subr.mxu0 0.0
    %253 = vmatpush1.msra.mxu0 0.0
    %254 = vmatprep.subr.mxu0 0.0
    %255 = vmatpush1.msra.mxu0 0.0
    %256 = vmatprep.subr.mxu0 0.0
    %257 = vmatpush1.msra.mxu0 0.0
    %258 = vmatprep.subr.mxu0 0.0
    %259 = vmatpush1.msra.mxu0 0.0
    %260 = vmatprep.subr.mxu0 0.0
    %261 = vmatpush1.msra.mxu0 0.0
    %262 = vmatprep.subr.mxu0 0.0
    %263 = vmatpush1.msra.mxu0 0.0
    %264 = vmatprep.mubr.f32.mxu0 0.0
    %265 = vmatmul.mubr.f32.gmra.mrb[0].mxu0 %v186
    %v266 = vpop.f32.mrb[0].mxu0
    %v267 = vadd.f32 %v182, %v266
    %v268 = vpop.f32.mrb[0].mxu0
    %269 = vmatprep.mubr.f32.mxu0 0.0
    %270 = vmatmul.mubr.f32.gmra.mrb[0].mxu0 %v189
    %v271 = vpop.f32.mrb[0].mxu0
    %v272 = vadd.f32 %v182, %v271
    %v273 = vpop.f32.mrb[0].mxu0
    %274 = vmatprep.mubr.f32.mxu0 0.0
    %275 = vmatmul.mubr.f32.gmra.mrb[0].mxu0 %v192
    %v276 = vpop.f32.mrb[0].mxu0
    %v277 = vadd.f32 %v182, %v276
    %v278 = vpop.f32.mrb[0].mxu0
    %279 = vmatprep.mubr.f32.mxu0 0.0
    %280 = vmatmul.mubr.f32.gmra.mrb[0].mxu0 %v195
    %v281 = vpop.f32.mrb[0].mxu0
    %v282 = vadd.f32 %v182, %v281
    %v283 = vpop.f32.mrb[0].mxu0
    %284 = vmatprep.mubr.f32.mxu0 0.0
    %285 = vmatmul.mubr.f32.gmra.mrb[0].mxu0 %v198
    %v286 = vpop.f32.mrb[0].mxu0
    %v287 = vadd.f32 %v182, %v286
    %v288 = vpop.f32.mrb[0].mxu0
    %289 = vdwg.mxu0
    %vm290 = vcmask 785408
    %291 = vst.msk [vmem:[#allocation2] sm:$0xff] %vm290, %v267
    %292 = vst.msk [vmem:[#allocation2 + $0x8] sm:$0xff] %vm290, %v272
    %293 = vst.msk [vmem:[#allocation2 + $0x10] sm:$0xff] %vm290, %v277
    %294 = vst.msk [vmem:[#allocation2 + $0x18] sm:$0xff] %vm290, %v282
    %295 = vst.msk [vmem:[#allocation2 + $0x20] sm:$0xff] %vm290, %v287
    %v296 = vld [vmem:[%s4] sm:$0xff]
    %v297 = vld [vmem:[%s4 + $0x8] sm:$0xff]
    %v298 = vld [vmem:[%s4 + $0x10] sm:$0xff]
    %v299 = vld [vmem:[%s4 + $0x18] sm:$0xff]
    %v300 = vld [vmem:[#allocation9] sm:$0x1]
    %v302 = vlaneseq
    %v303 = vshrl.u32 %v302, 7
    %v304 = vsub.s32 0, %v303
    %v305 = vrot.slane %v300, %v304
    %v306 = vld [vmem:[%s1] sm:$0xff]
    loop: start=0, step=1, limit=5
    $region98: #{decoder_rnn_forward.1} parent=1 // loop_pre_header
      _
    $region99: #{decoder_rnn_forward.1} parent=1 // loop_header
      %s308 = sphi 0, %s312
      %p309 = scmp.ge.s32.totalorder %s308, 5
      %v313 = vphi %v306, %v426
    $region100: #{decoder_rnn_forward.1} parent=1 // loop_header_branch
      %311 = sbr.rel (%p309) target = $region104
    $region101: #{decoder_rnn_forward.1} parent=1 // loop_body
      %s314 = smul.u32 %s308, 8
      %s315 = scalar_lea.vmem [#allocation2], %s314
      %v316 = vld [vmem:[%s315] sm:$0xff]
      %vm317 = vcmask 261120
      %v319 = vsel %vm317, %v313, 0
      %321 = vmatprep.subr.mxu0 0.0
      %322 = vmatpush1.msra.mxu0 %v296
      %323 = vmatprep.subr.mxu0 0.0
      %324 = vmatpush1.msra.mxu0 %v297
      %325 = vmatprep.subr.mxu0 0.0
      %326 = vmatpush1.msra.mxu0 %v298
      %327 = vmatprep.subr.mxu0 0.0
      %328 = vmatpush1.msra.mxu0 %v299
      %329 = vmatprep.subr.mxu0 0.0
      %330 = vmatpush1.msra.mxu0 0.0
      %331 = vmatprep.subr.mxu0 0.0
      %332 = vmatpush1.msra.mxu0 0.0
      %333 = vmatprep.subr.mxu0 0.0
      %334 = vmatpush1.msra.mxu0 0.0
      %335 = vmatprep.subr.mxu0 0.0
      %336 = vmatpush1.msra.mxu0 0.0
      %337 = vmatprep.subr.mxu0 0.0
      %338 = vmatpush1.msra.mxu0 0.0
      %339 = vmatprep.subr.mxu0 0.0
      %340 = vmatpush1.msra.mxu0 0.0
      %341 = vmatprep.subr.mxu0 0.0
      %342 = vmatpush1.msra.mxu0 0.0
      %343 = vmatprep.subr.mxu0 0.0
      %344 = vmatpush1.msra.mxu0 0.0
      %345 = vmatprep.subr.mxu0 0.0
      %346 = vmatpush1.msra.mxu0 0.0
      %347 = vmatprep.subr.mxu0 0.0
      %348 = vmatpush1.msra.mxu0 0.0
      %349 = vmatprep.subr.mxu0 0.0
      %350 = vmatpush1.msra.mxu0 0.0
      %351 = vmatprep.subr.mxu0 0.0
      %352 = vmatpush1.msra.mxu0 0.0
      %353 = vmatprep.subr.mxu0 0.0
      %354 = vmatpush1.msra.mxu0 0.0
      %355 = vmatprep.subr.mxu0 0.0
      %356 = vmatpush1.msra.mxu0 0.0
      %357 = vmatprep.subr.mxu0 0.0
      %358 = vmatpush1.msra.mxu0 0.0
      %359 = vmatprep.subr.mxu0 0.0
      %360 = vmatpush1.msra.mxu0 0.0
      %361 = vmatprep.subr.mxu0 0.0
      %362 = vmatpush1.msra.mxu0 0.0
      %363 = vmatprep.subr.mxu0 0.0
      %364 = vmatpush1.msra.mxu0 0.0
      %365 = vmatprep.subr.mxu0 0.0
      %366 = vmatpush1.msra.mxu0 0.0
      %367 = vmatprep.subr.mxu0 0.0
      %368 = vmatpush1.msra.mxu0 0.0
      %369 = vmatprep.subr.mxu0 0.0
      %370 = vmatpush1.msra.mxu0 0.0
      %371 = vmatprep.subr.mxu0 0.0
      %372 = vmatpush1.msra.mxu0 0.0
      %373 = vmatprep.subr.mxu0 0.0
      %374 = vmatpush1.msra.mxu0 0.0
      %375 = vmatprep.subr.mxu0 0.0
      %376 = vmatpush1.msra.mxu0 0.0
      %377 = vmatprep.subr.mxu0 0.0
      %378 = vmatpush1.msra.mxu0 0.0
      %379 = vmatprep.subr.mxu0 0.0
      %380 = vmatpush1.msra.mxu0 0.0
      %381 = vmatprep.subr.mxu0 0.0
      %382 = vmatpush1.msra.mxu0 0.0
      %383 = vmatprep.subr.mxu0 0.0
      %384 = vmatpush1.msra.mxu0 0.0
      %385 = vmatprep.mubr.f32.mxu0 0.0
      %386 = vmatmul.mubr.f32.gmra.mrb[0].mxu0 %v319
      %v387 = vpop.f32.mrb[0].mxu0
      %v388 = vadd.f32 0.0, %v387
      %v389 = vpop.f32.mrb[0].mxu0
      %390 = vdwg.mxu0
      %v391 = vadd.f32 %v316, %v388
      %v392 = vxor.u32 %v391, 2147483648
      %v393 = vmul.f32 %v392, 1.442695
      %v394 = vpow.pop %v393
      %v395 = vadd.f32 %v394, 1.0
      %v396 = vrcp.pop %v395
      %v397 = vmul.f32 1.0, %v396
      %398 = vrot.lane.b32.xlu0 %v305, 64
      %v399 = vpop.permute.xlu0 %398
      %v401 = vadd.f32 %v388, %v399
      %403 = vrot.lane.b32.xlu0 %v401, 64
      %v404 = vpop.permute.xlu0 %403
      %v406 = vmul.f32 %v397, %v404
      %408 = vrot.lane.b32.xlu0 %v406, 64
      %v409 = vpop.permute.xlu0 %408
      %v411 = vadd.f32 %v316, %v409
      %v412 = vtanh.pop %v411
      %v413 = vsub.f32 1.0, %v397
      %415 = vrot.lane.b32.xlu0 %v412, 96
      %v416 = vpop.permute.xlu0 %415
      %v418 = vmul.f32 %v413, %v416
      %419 = vrot.lane.b32.xlu0 %v313, 32
      %v420 = vpop.permute.xlu0 %419
      %v422 = vmul.f32 %v397, %v420
      %v423 = vadd.f32 %v418, %v422
      %425 = vrot.lane.b32.xlu0 %v423, 96
      %v426 = vpop.permute.xlu0 %425
      %s428 = scalar_lea.vmem [#allocation3], %s314
      %429 = vst.msk [vmem:[%s428] sm:$0xff] %vm317, %v426
    $region102: #{decoder_rnn_forward.1} parent=1 // loop_footer
      %s312 = sadd.s32 1, %s308
    $region103: #{decoder_rnn_forward.1} parent=1 // loop_footer_branch
      %307 = sbr.rel target = $region99
    $region104: #{decoder_rnn_forward.1} parent=1 // loop_exit
      _
    %vm430 = vcmask 261120
    %431 = vst.msk [vmem:[%s16] sm:$0xff] %vm430, %v313
    %s432 = scalar_lea.vmem %s3, 16
    %v433 = vld [vmem:[%s432] sm:$0xff]
    %v434 = vld [vmem:[%s432 + $0x8] sm:$0xff]
    %v435 = vld [vmem:[%s0] sm:$0xff]
    %v436 = vld [vmem:[%s0 + $0x8] sm:$0xff]
    %v437 = vld [vmem:[%s0 + $0x10] sm:$0xff]
    %v438 = vld [vmem:[%s0 + $0x18] sm:$0xff]
    %v439 = vld [vmem:[%s0 + $0x20] sm:$0xff]
    %s440 = scalar_lea.vmem [#allocation7], 1
    %v441 = vld [vmem:[%s440] sm:$0x1]
    %v443 = vlaneseq
    %v444 = vshrl.u32 %v443, 7
    %v445 = vsub.s32 0, %v444
    %v446 = vrot.slane %v441, %v445
    %v449 = vsel %vm184, %v435, 0
    %v452 = vsel %vm184, %v436, 0
    %v455 = vsel %vm184, %v437, 0
    %v458 = vsel %vm184, %v438, 0
    %v461 = vsel %vm184, %v439, 0
    %463 = vmatprep.subr.mxu0 0.0
    %464 = vmatpush1.msra.mxu0 %v433
    %465 = vmatprep.subr.mxu0 0.0
    %466 = vmatpush1.msra.mxu0 %v434
    %467 = vmatprep.subr.mxu0 0.0
    %468 = vmatpush1.msra.mxu0 0.0
    %469 = vmatprep.subr.mxu0 0.0
    %470 = vmatpush1.msra.mxu0 0.0
    %471 = vmatprep.subr.mxu0 0.0
    %472 = vmatpush1.msra.mxu0 0.0
    %473 = vmatprep.subr.mxu0 0.0
    %474 = vmatpush1.msra.mxu0 0.0
    %475 = vmatprep.subr.mxu0 0.0
    %476 = vmatpush1.msra.mxu0 0.0
    %477 = vmatprep.subr.mxu0 0.0
    %478 = vmatpush1.msra.mxu0 0.0
    %479 = vmatprep.subr.mxu0 0.0
    %480 = vmatpush1.msra.mxu0 0.0
    %481 = vmatprep.subr.mxu0 0.0
    %482 = vmatpush1.msra.mxu0 0.0
    %483 = vmatprep.subr.mxu0 0.0
    %484 = vmatpush1.msra.mxu0 0.0
    %485 = vmatprep.subr.mxu0 0.0
    %486 = vmatpush1.msra.mxu0 0.0
    %487 = vmatprep.subr.mxu0 0.0
    %488 = vmatpush1.msra.mxu0 0.0
    %489 = vmatprep.subr.mxu0 0.0
    %490 = vmatpush1.msra.mxu0 0.0
    %491 = vmatprep.subr.mxu0 0.0
    %492 = vmatpush1.msra.mxu0 0.0
    %493 = vmatprep.subr.mxu0 0.0
    %494 = vmatpush1.msra.mxu0 0.0
    %495 = vmatprep.subr.mxu0 0.0
    %496 = vmatpush1.msra.mxu0 0.0
    %497 = vmatprep.subr.mxu0 0.0
    %498 = vmatpush1.msra.mxu0 0.0
    %499 = vmatprep.subr.mxu0 0.0
    %500 = vmatpush1.msra.mxu0 0.0
    %501 = vmatprep.subr.mxu0 0.0
    %502 = vmatpush1.msra.mxu0 0.0
    %503 = vmatprep.subr.mxu0 0.0
    %504 = vmatpush1.msra.mxu0 0.0
    %505 = vmatprep.subr.mxu0 0.0
    %506 = vmatpush1.msra.mxu0 0.0
    %507 = vmatprep.subr.mxu0 0.0
    %508 = vmatpush1.msra.mxu0 0.0
    %509 = vmatprep.subr.mxu0 0.0
    %510 = vmatpush1.msra.mxu0 0.0
    %511 = vmatprep.subr.mxu0 0.0
    %512 = vmatpush1.msra.mxu0 0.0
    %513 = vmatprep.subr.mxu0 0.0
    %514 = vmatpush1.msra.mxu0 0.0
    %515 = vmatprep.subr.mxu0 0.0
    %516 = vmatpush1.msra.mxu0 0.0
    %517 = vmatprep.subr.mxu0 0.0
    %518 = vmatpush1.msra.mxu0 0.0
    %519 = vmatprep.subr.mxu0 0.0
    %520 = vmatpush1.msra.mxu0 0.0
    %521 = vmatprep.subr.mxu0 0.0
    %522 = vmatpush1.msra.mxu0 0.0
    %523 = vmatprep.subr.mxu0 0.0
    %524 = vmatpush1.msra.mxu0 0.0
    %525 = vmatprep.subr.mxu0 0.0
    %526 = vmatpush1.msra.mxu0 0.0
    %527 = vmatprep.mubr.f32.mxu0 0.0
    %528 = vmatmul.mubr.f32.gmra.mrb[0].mxu0 %v449
    %v529 = vpop.f32.mrb[0].mxu0
    %v530 = vadd.f32 %v446, %v529
    %v531 = vpop.f32.mrb[0].mxu0
    %532 = vmatprep.mubr.f32.mxu0 0.0
    %533 = vmatmul.mubr.f32.gmra.mrb[0].mxu0 %v452
    %v534 = vpop.f32.mrb[0].mxu0
    %v535 = vadd.f32 %v446, %v534
    %v536 = vpop.f32.mrb[0].mxu0
    %537 = vmatprep.mubr.f32.mxu0 0.0
    %538 = vmatmul.mubr.f32.gmra.mrb[0].mxu0 %v455
    %v539 = vpop.f32.mrb[0].mxu0
    %v540 = vadd.f32 %v446, %v539
    %v541 = vpop.f32.mrb[0].mxu0
    %542 = vmatprep.mubr.f32.mxu0 0.0
    %543 = vmatmul.mubr.f32.gmra.mrb[0].mxu0 %v458
    %v544 = vpop.f32.mrb[0].mxu0
    %v545 = vadd.f32 %v446, %v544
    %v546 = vpop.f32.mrb[0].mxu0
    %547 = vmatprep.mubr.f32.mxu0 0.0
    %548 = vmatmul.mubr.f32.gmra.mrb[0].mxu0 %v461
    %v549 = vpop.f32.mrb[0].mxu0
    %v550 = vadd.f32 %v446, %v549
    %v551 = vpop.f32.mrb[0].mxu0
    %552 = vdwg.mxu0
    %553 = vst.msk [vmem:[#allocation2] sm:$0xff] %vm290, %v530
    %554 = vst.msk [vmem:[#allocation2 + $0x8] sm:$0xff] %vm290, %v535
    %555 = vst.msk [vmem:[#allocation2 + $0x10] sm:$0xff] %vm290, %v540
    %556 = vst.msk [vmem:[#allocation2 + $0x18] sm:$0xff] %vm290, %v545
    %557 = vst.msk [vmem:[#allocation2 + $0x20] sm:$0xff] %vm290, %v550
    %s558 = scalar_lea.vmem %s4, 32
    %v559 = vld [vmem:[%s558] sm:$0xff]
    %v560 = vld [vmem:[%s558 + $0x8] sm:$0xff]
    %v561 = vld [vmem:[%s558 + $0x10] sm:$0xff]
    %v562 = vld [vmem:[%s558 + $0x18] sm:$0xff]
    %s563 = scalar_lea.vmem [#allocation9], 1
    %v564 = vld [vmem:[%s563] sm:$0x1]
    %v566 = vlaneseq
    %v567 = vshrl.u32 %v566, 7
    %v568 = vsub.s32 0, %v567
    %v569 = vrot.slane %v564, %v568
    %s570 = scalar_lea.vmem %s1, 8
    %v571 = vld [vmem:[%s570] sm:$0xff]
    loop: start=0, step=1, limit=5
    $region105: #{decoder_rnn_forward.1} parent=1 // loop_pre_header
      _
    $region106: #{decoder_rnn_forward.1} parent=1 // loop_header
      %s573 = sphi 0, %s577
      %p574 = scmp.ge.s32.totalorder %s573, 5
      %v578 = vphi %v571, %v691
    $region107: #{decoder_rnn_forward.1} parent=1 // loop_header_branch
      %576 = sbr.rel (%p574) target = $region111
    $region108: #{decoder_rnn_forward.1} parent=1 // loop_body
      %s579 = ssub.s32 4, %s573
      %s580 = smul.u32 %s579, 8
      %s581 = scalar_lea.vmem [#allocation2], %s580
      %v582 = vld [vmem:[%s581] sm:$0xff]
      %v584 = vsel %vm430, %v578, 0
      %586 = vmatprep.subr.mxu0 0.0
      %587 = vmatpush1.msra.mxu0 %v559
      %588 = vmatprep.subr.mxu0 0.0
      %589 = vmatpush1.msra.mxu0 %v560
      %590 = vmatprep.subr.mxu0 0.0
      %591 = vmatpush1.msra.mxu0 %v561
      %592 = vmatprep.subr.mxu0 0.0
      %593 = vmatpush1.msra.mxu0 %v562
      %594 = vmatprep.subr.mxu0 0.0
      %595 = vmatpush1.msra.mxu0 0.0
      %596 = vmatprep.subr.mxu0 0.0
      %597 = vmatpush1.msra.mxu0 0.0
      %598 = vmatprep.subr.mxu0 0.0
      %599 = vmatpush1.msra.mxu0 0.0
      %600 = vmatprep.subr.mxu0 0.0
      %601 = vmatpush1.msra.mxu0 0.0
      %602 = vmatprep.subr.mxu0 0.0
      %603 = vmatpush1.msra.mxu0 0.0
      %604 = vmatprep.subr.mxu0 0.0
      %605 = vmatpush1.msra.mxu0 0.0
      %606 = vmatprep.subr.mxu0 0.0
      %607 = vmatpush1.msra.mxu0 0.0
      %608 = vmatprep.subr.mxu0 0.0
      %609 = vmatpush1.msra.mxu0 0.0
      %610 = vmatprep.subr.mxu0 0.0
      %611 = vmatpush1.msra.mxu0 0.0
      %612 = vmatprep.subr.mxu0 0.0
      %613 = vmatpush1.msra.mxu0 0.0
      %614 = vmatprep.subr.mxu0 0.0
      %615 = vmatpush1.msra.mxu0 0.0
      %616 = vmatprep.subr.mxu0 0.0
      %617 = vmatpush1.msra.mxu0 0.0
      %618 = vmatprep.subr.mxu0 0.0
      %619 = vmatpush1.msra.mxu0 0.0
      %620 = vmatprep.subr.mxu0 0.0
      %621 = vmatpush1.msra.mxu0 0.0
      %622 = vmatprep.subr.mxu0 0.0
      %623 = vmatpush1.msra.mxu0 0.0
      %624 = vmatprep.subr.mxu0 0.0
      %625 = vmatpush1.msra.mxu0 0.0
      %626 = vmatprep.subr.mxu0 0.0
      %627 = vmatpush1.msra.mxu0 0.0
      %628 = vmatprep.subr.mxu0 0.0
      %629 = vmatpush1.msra.mxu0 0.0
      %630 = vmatprep.subr.mxu0 0.0
      %631 = vmatpush1.msra.mxu0 0.0
      %632 = vmatprep.subr.mxu0 0.0
      %633 = vmatpush1.msra.mxu0 0.0
      %634 = vmatprep.subr.mxu0 0.0
      %635 = vmatpush1.msra.mxu0 0.0
      %636 = vmatprep.subr.mxu0 0.0
      %637 = vmatpush1.msra.mxu0 0.0
      %638 = vmatprep.subr.mxu0 0.0
      %639 = vmatpush1.msra.mxu0 0.0
      %640 = vmatprep.subr.mxu0 0.0
      %641 = vmatpush1.msra.mxu0 0.0
      %642 = vmatprep.subr.mxu0 0.0
      %643 = vmatpush1.msra.mxu0 0.0
      %644 = vmatprep.subr.mxu0 0.0
      %645 = vmatpush1.msra.mxu0 0.0
      %646 = vmatprep.subr.mxu0 0.0
      %647 = vmatpush1.msra.mxu0 0.0
      %648 = vmatprep.subr.mxu0 0.0
      %649 = vmatpush1.msra.mxu0 0.0
      %650 = vmatprep.mubr.f32.mxu0 0.0
      %651 = vmatmul.mubr.f32.gmra.mrb[0].mxu0 %v584
      %v652 = vpop.f32.mrb[0].mxu0
      %v653 = vadd.f32 0.0, %v652
      %v654 = vpop.f32.mrb[0].mxu0
      %655 = vdwg.mxu0
      %v656 = vadd.f32 %v582, %v653
      %v657 = vxor.u32 %v656, 2147483648
      %v658 = vmul.f32 %v657, 1.442695
      %v659 = vpow.pop %v658
      %v660 = vadd.f32 %v659, 1.0
      %v661 = vrcp.pop %v660
      %v662 = vmul.f32 1.0, %v661
      %663 = vrot.lane.b32.xlu0 %v569, 64
      %v664 = vpop.permute.xlu0 %663
      %v666 = vadd.f32 %v653, %v664
      %668 = vrot.lane.b32.xlu0 %v666, 64
      %v669 = vpop.permute.xlu0 %668
      %v671 = vmul.f32 %v662, %v669
      %673 = vrot.lane.b32.xlu0 %v671, 64
      %v674 = vpop.permute.xlu0 %673
      %v676 = vadd.f32 %v582, %v674
      %v677 = vtanh.pop %v676
      %v678 = vsub.f32 1.0, %v662
      %680 = vrot.lane.b32.xlu0 %v677, 96
      %v681 = vpop.permute.xlu0 %680
      %v683 = vmul.f32 %v678, %v681
      %684 = vrot.lane.b32.xlu0 %v578, 32
      %v685 = vpop.permute.xlu0 %684
      %v687 = vmul.f32 %v662, %v685
      %v688 = vadd.f32 %v683, %v687
      %690 = vrot.lane.b32.xlu0 %v688, 96
      %v691 = vpop.permute.xlu0 %690
      %s693 = scalar_lea.vmem [#allocation4], %s580
      %694 = vst.msk [vmem:[%s693] sm:$0xff] %vm430, %v691
    $region109: #{decoder_rnn_forward.1} parent=1 // loop_footer
      %s577 = sadd.s32 1, %s573
    $region110: #{decoder_rnn_forward.1} parent=1 // loop_footer_branch
      %572 = sbr.rel target = $region106
    $region111: #{decoder_rnn_forward.1} parent=1 // loop_exit
      _
    %696 = vrot.lane.b32.xlu0 %v578, 32
    %v697 = vpop.permute.xlu0 %696
    %vm699 = vcmask 523520
    %700 = vst.msk [vmem:[%s16] sm:$0xff] %vm699, %v697
    %v701 = vld [vmem:[#allocation11] sm:$0xff]
    %v702 = vld [vmem:[#allocation11 + $0x8] sm:$0xff]
    %v703 = vld [vmem:[#allocation11 + $0x10] sm:$0xff]
    %v704 = vld [vmem:[#allocation11 + $0x18] sm:$0xff]
    %v705 = vld [vmem:[#allocation11 + $0x20] sm:$0xff]
    %v706 = vld [vmem:[#allocation11 + $0x28] sm:$0xff]
    %v707 = vld [vmem:[#allocation11 + $0x30] sm:$0xff]
    %v708 = vld [vmem:[#allocation11 + $0x38] sm:$0xff]
    %v709 = vld [vmem:[#allocation3] sm:$0xff]
    %v710 = vld [vmem:[#allocation3 + $0x8] sm:$0xff]
    %v711 = vld [vmem:[#allocation3 + $0x10] sm:$0xff]
    %v712 = vld [vmem:[#allocation3 + $0x18] sm:$0xff]
    %v713 = vld [vmem:[#allocation3 + $0x20] sm:$0xff]
    %v714 = vld [vmem:[#allocation4] sm:$0xff]
    %v715 = vld [vmem:[#allocation4 + $0x8] sm:$0xff]
    %v716 = vld [vmem:[#allocation4 + $0x10] sm:$0xff]
    %v717 = vld [vmem:[#allocation4 + $0x18] sm:$0xff]
    %v718 = vld [vmem:[#allocation4 + $0x20] sm:$0xff]
    %v720 = vsel %vm430, %v714, 0
    %v723 = vsel %vm430, %v715, 0
    %v726 = vsel %vm430, %v716, 0
    %v729 = vsel %vm430, %v717, 0
    %v732 = vsel %vm430, %v718, 0
    %734 = vmatprep.subr.mxu0 0.0
    %735 = vmatpush1.msra.mxu0 %v705
    %736 = vmatprep.subr.mxu0 0.0
    %737 = vmatpush1.msra.mxu0 %v706
    %738 = vmatprep.subr.mxu0 0.0
    %739 = vmatpush1.msra.mxu0 %v707
    %740 = vmatprep.subr.mxu0 0.0
    %741 = vmatpush1.msra.mxu0 %v708
    %742 = vmatprep.subr.mxu0 0.0
    %743 = vmatpush1.msra.mxu0 0.0
    %744 = vmatprep.subr.mxu0 0.0
    %745 = vmatpush1.msra.mxu0 0.0
    %746 = vmatprep.subr.mxu0 0.0
    %747 = vmatpush1.msra.mxu0 0.0
    %748 = vmatprep.subr.mxu0 0.0
    %749 = vmatpush1.msra.mxu0 0.0
    %750 = vmatprep.subr.mxu0 0.0
    %751 = vmatpush1.msra.mxu0 0.0
    %752 = vmatprep.subr.mxu0 0.0
    %753 = vmatpush1.msra.mxu0 0.0
    %754 = vmatprep.subr.mxu0 0.0
    %755 = vmatpush1.msra.mxu0 0.0
    %756 = vmatprep.subr.mxu0 0.0
    %757 = vmatpush1.msra.mxu0 0.0
    %758 = vmatprep.subr.mxu0 0.0
    %759 = vmatpush1.msra.mxu0 0.0
    %760 = vmatprep.subr.mxu0 0.0
    %761 = vmatpush1.msra.mxu0 0.0
    %762 = vmatprep.subr.mxu0 0.0
    %763 = vmatpush1.msra.mxu0 0.0
    %764 = vmatprep.subr.mxu0 0.0
    %765 = vmatpush1.msra.mxu0 0.0
    %766 = vmatprep.subr.mxu0 0.0
    %767 = vmatpush1.msra.mxu0 0.0
    %768 = vmatprep.subr.mxu0 0.0
    %769 = vmatpush1.msra.mxu0 0.0
    %770 = vmatprep.subr.mxu0 0.0
    %771 = vmatpush1.msra.mxu0 0.0
    %772 = vmatprep.subr.mxu0 0.0
    %773 = vmatpush1.msra.mxu0 0.0
    %774 = vmatprep.subr.mxu0 0.0
    %775 = vmatpush1.msra.mxu0 0.0
    %776 = vmatprep.subr.mxu0 0.0
    %777 = vmatpush1.msra.mxu0 0.0
    %778 = vmatprep.subr.mxu0 0.0
    %779 = vmatpush1.msra.mxu0 0.0
    %780 = vmatprep.subr.mxu0 0.0
    %781 = vmatpush1.msra.mxu0 0.0
    %782 = vmatprep.subr.mxu0 0.0
    %783 = vmatpush1.msra.mxu0 0.0
    %784 = vmatprep.subr.mxu0 0.0
    %785 = vmatpush1.msra.mxu0 0.0
    %786 = vmatprep.subr.mxu0 0.0
    %787 = vmatpush1.msra.mxu0 0.0
    %788 = vmatprep.subr.mxu0 0.0
    %789 = vmatpush1.msra.mxu0 0.0
    %790 = vmatprep.subr.mxu0 0.0
    %791 = vmatpush1.msra.mxu0 0.0
    %792 = vmatprep.subr.mxu0 0.0
    %793 = vmatpush1.msra.mxu0 0.0
    %794 = vmatprep.subr.mxu0 0.0
    %795 = vmatpush1.msra.mxu0 0.0
    %796 = vmatprep.subr.mxu0 0.0
    %797 = vmatpush1.msra.mxu0 0.0
    %798 = vmatprep.mubr.f32.mxu0 0.0
    %799 = vmatmul.mubr.f32.gmra.mrb[0].mxu0 %v720
    %v800 = vpop.f32.mrb[0].mxu0
    %v801 = vadd.f32 0.0, %v800
    %v802 = vpop.f32.mrb[0].mxu0
    %803 = vmatprep.mubr.f32.mxu0 0.0
    %804 = vmatmul.mubr.f32.gmra.mrb[0].mxu0 %v723
    %v805 = vpop.f32.mrb[0].mxu0
    %v806 = vadd.f32 0.0, %v805
    %v807 = vpop.f32.mrb[0].mxu0
    %808 = vmatprep.mubr.f32.mxu0 0.0
    %809 = vmatmul.mubr.f32.gmra.mrb[0].mxu0 %v726
    %v810 = vpop.f32.mrb[0].mxu0
    %v811 = vadd.f32 0.0, %v810
    %v812 = vpop.f32.mrb[0].mxu0
    %813 = vmatprep.mubr.f32.mxu0 0.0
    %814 = vmatmul.mubr.f32.gmra.mrb[0].mxu0 %v729
    %v815 = vpop.f32.mrb[0].mxu0
    %v816 = vadd.f32 0.0, %v815
    %v817 = vpop.f32.mrb[0].mxu0
    %818 = vmatprep.mubr.f32.mxu0 0.0
    %819 = vmatmul.mubr.f32.gmra.mrb[0].mxu0 %v732
    %v820 = vpop.f32.mrb[0].mxu0
    %v821 = vadd.f32 0.0, %v820
    %v822 = vpop.f32.mrb[0].mxu0
    %823 = vdwg.mxu0
    %v825 = vsel %vm430, %v709, 0
    %v828 = vsel %vm430, %v710, 0
    %v831 = vsel %vm430, %v711, 0
    %v834 = vsel %vm430, %v712, 0
    %v837 = vsel %vm430, %v713, 0
    %839 = vmatprep.subr.mxu0 0.0
    %840 = vmatpush1.msra.mxu0 %v701
    %841 = vmatprep.subr.mxu0 0.0
    %842 = vmatpush1.msra.mxu0 %v702
    %843 = vmatprep.subr.mxu0 0.0
    %844 = vmatpush1.msra.mxu0 %v703
    %845 = vmatprep.subr.mxu0 0.0
    %846 = vmatpush1.msra.mxu0 %v704
    %847 = vmatprep.subr.mxu0 0.0
    %848 = vmatpush1.msra.mxu0 0.0
    %849 = vmatprep.subr.mxu0 0.0
    %850 = vmatpush1.msra.mxu0 0.0
    %851 = vmatprep.subr.mxu0 0.0
    %852 = vmatpush1.msra.mxu0 0.0
    %853 = vmatprep.subr.mxu0 0.0
    %854 = vmatpush1.msra.mxu0 0.0
    %855 = vmatprep.subr.mxu0 0.0
    %856 = vmatpush1.msra.mxu0 0.0
    %857 = vmatprep.subr.mxu0 0.0
    %858 = vmatpush1.msra.mxu0 0.0
    %859 = vmatprep.subr.mxu0 0.0
    %860 = vmatpush1.msra.mxu0 0.0
    %861 = vmatprep.subr.mxu0 0.0
    %862 = vmatpush1.msra.mxu0 0.0
    %863 = vmatprep.subr.mxu0 0.0
    %864 = vmatpush1.msra.mxu0 0.0
    %865 = vmatprep.subr.mxu0 0.0
    %866 = vmatpush1.msra.mxu0 0.0
    %867 = vmatprep.subr.mxu0 0.0
    %868 = vmatpush1.msra.mxu0 0.0
    %869 = vmatprep.subr.mxu0 0.0
    %870 = vmatpush1.msra.mxu0 0.0
    %871 = vmatprep.subr.mxu0 0.0
    %872 = vmatpush1.msra.mxu0 0.0
    %873 = vmatprep.subr.mxu0 0.0
    %874 = vmatpush1.msra.mxu0 0.0
    %875 = vmatprep.subr.mxu0 0.0
    %876 = vmatpush1.msra.mxu0 0.0
    %877 = vmatprep.subr.mxu0 0.0
    %878 = vmatpush1.msra.mxu0 0.0
    %879 = vmatprep.subr.mxu0 0.0
    %880 = vmatpush1.msra.mxu0 0.0
    %881 = vmatprep.subr.mxu0 0.0
    %882 = vmatpush1.msra.mxu0 0.0
    %883 = vmatprep.subr.mxu0 0.0
    %884 = vmatpush1.msra.mxu0 0.0
    %885 = vmatprep.subr.mxu0 0.0
    %886 = vmatpush1.msra.mxu0 0.0
    %887 = vmatprep.subr.mxu0 0.0
    %888 = vmatpush1.msra.mxu0 0.0
    %889 = vmatprep.subr.mxu0 0.0
    %890 = vmatpush1.msra.mxu0 0.0
    %891 = vmatprep.subr.mxu0 0.0
    %892 = vmatpush1.msra.mxu0 0.0
    %893 = vmatprep.subr.mxu0 0.0
    %894 = vmatpush1.msra.mxu0 0.0
    %895 = vmatprep.subr.mxu0 0.0
    %896 = vmatpush1.msra.mxu0 0.0
    %897 = vmatprep.subr.mxu0 0.0
    %898 = vmatpush1.msra.mxu0 0.0
    %899 = vmatprep.subr.mxu0 0.0
    %900 = vmatpush1.msra.mxu0 0.0
    %901 = vmatprep.subr.mxu0 0.0
    %902 = vmatpush1.msra.mxu0 0.0
    %903 = vmatprep.mubr.f32.mxu0 0.0
    %904 = vmatmul.mubr.f32.gmra.mrb[0].mxu0 %v825
    %v905 = vpop.f32.mrb[0].mxu0
    %v906 = vadd.f32 %v801, %v905
    %v907 = vpop.f32.mrb[0].mxu0
    %908 = vmatprep.mubr.f32.mxu0 0.0
    %909 = vmatmul.mubr.f32.gmra.mrb[0].mxu0 %v828
    %v910 = vpop.f32.mrb[0].mxu0
    %v911 = vadd.f32 %v806, %v910
    %v912 = vpop.f32.mrb[0].mxu0
    %913 = vmatprep.mubr.f32.mxu0 0.0
    %914 = vmatmul.mubr.f32.gmra.mrb[0].mxu0 %v831
    %v915 = vpop.f32.mrb[0].mxu0
    %v916 = vadd.f32 %v811, %v915
    %v917 = vpop.f32.mrb[0].mxu0
    %918 = vmatprep.mubr.f32.mxu0 0.0
    %919 = vmatmul.mubr.f32.gmra.mrb[0].mxu0 %v834
    %v920 = vpop.f32.mrb[0].mxu0
    %v921 = vadd.f32 %v816, %v920
    %v922 = vpop.f32.mrb[0].mxu0
    %923 = vmatprep.mubr.f32.mxu0 0.0
    %924 = vmatmul.mubr.f32.gmra.mrb[0].mxu0 %v837
    %v925 = vpop.f32.mrb[0].mxu0
    %v926 = vadd.f32 %v821, %v925
    %v927 = vpop.f32.mrb[0].mxu0
    %928 = vdwg.mxu0
    %v929 = vld [vmem:[#allocation14] sm:$0x1]
    %v931 = vlaneseq
    %v932 = vshrl.u32 %v931, 7
    %v933 = vsub.s32 0, %v932
    %v934 = vrot.slane %v929, %v933
    %v936 = vadd.f32 %v906, %v934
    %v937 = vadd.f32 %v911, %v934
    %v938 = vadd.f32 %v916, %v934
    %v939 = vadd.f32 %v921, %v934
    %v940 = vadd.f32 %v926, %v934
    %941 = vst.msk [vmem:[#allocation2] sm:$0xff] %vm290, %v936
    %942 = vst.msk [vmem:[#allocation2 + $0x8] sm:$0xff] %vm290, %v937
    %943 = vst.msk [vmem:[#allocation2 + $0x10] sm:$0xff] %vm290, %v938
    %944 = vst.msk [vmem:[#allocation2 + $0x18] sm:$0xff] %vm290, %v939
    %945 = vst.msk [vmem:[#allocation2 + $0x20] sm:$0xff] %vm290, %v940
    %v946 = vld [vmem:[#allocation12] sm:$0xff]
    %v947 = vld [vmem:[#allocation12 + $0x8] sm:$0xff]
    %v948 = vld [vmem:[#allocation12 + $0x10] sm:$0xff]
    %v949 = vld [vmem:[#allocation12 + $0x18] sm:$0xff]
    %v950 = vld [vmem:[#allocation15] sm:$0x1]
    %v952 = vlaneseq
    %v953 = vshrl.u32 %v952, 7
    %v954 = vsub.s32 0, %v953
    %v955 = vrot.slane %v950, %v954
    %s956 = scalar_lea.vmem %s1, 16
    %v957 = vld [vmem:[%s956] sm:$0xff]
    loop: start=0, step=1, limit=5
    $region112: #{decoder_rnn_forward.1} parent=1 // loop_pre_header
      _
    $region113: #{decoder_rnn_forward.1} parent=1 // loop_header
      %s959 = sphi 0, %s963
      %p960 = scmp.ge.s32.totalorder %s959, 5
      %v964 = vphi %v957, %v1082
      %v965 = vphi 0.0, %v1079
    $region114: #{decoder_rnn_forward.1} parent=1 // loop_header_branch
      %962 = sbr.rel (%p960) target = $region118
    $region115: #{decoder_rnn_forward.1} parent=1 // loop_body
      %s966 = smul.u32 %s959, 8
      %s967 = scalar_lea.vmem [#allocation2], %s966
      %v968 = vld [vmem:[%s967] sm:$0xff]
      %v970 = vsel %vm430, %v964, 0
      %972 = vmatprep.subr.mxu0 0.0
      %973 = vmatpush1.msra.mxu0 %v946
      %974 = vmatprep.subr.mxu0 0.0
      %975 = vmatpush1.msra.mxu0 %v947
      %976 = vmatprep.subr.mxu0 0.0
      %977 = vmatpush1.msra.mxu0 %v948
      %978 = vmatprep.subr.mxu0 0.0
      %979 = vmatpush1.msra.mxu0 %v949
      %980 = vmatprep.subr.mxu0 0.0
      %981 = vmatpush1.msra.mxu0 0.0
      %982 = vmatprep.subr.mxu0 0.0
      %983 = vmatpush1.msra.mxu0 0.0
      %984 = vmatprep.subr.mxu0 0.0
      %985 = vmatpush1.msra.mxu0 0.0
      %986 = vmatprep.subr.mxu0 0.0
      %987 = vmatpush1.msra.mxu0 0.0
      %988 = vmatprep.subr.mxu0 0.0
      %989 = vmatpush1.msra.mxu0 0.0
      %990 = vmatprep.subr.mxu0 0.0
      %991 = vmatpush1.msra.mxu0 0.0
      %992 = vmatprep.subr.mxu0 0.0
      %993 = vmatpush1.msra.mxu0 0.0
      %994 = vmatprep.subr.mxu0 0.0
      %995 = vmatpush1.msra.mxu0 0.0
      %996 = vmatprep.subr.mxu0 0.0
      %997 = vmatpush1.msra.mxu0 0.0
      %998 = vmatprep.subr.mxu0 0.0
      %999 = vmatpush1.msra.mxu0 0.0
      %1000 = vmatprep.subr.mxu0 0.0
      %1001 = vmatpush1.msra.mxu0 0.0
      %1002 = vmatprep.subr.mxu0 0.0
      %1003 = vmatpush1.msra.mxu0 0.0
      %1004 = vmatprep.subr.mxu0 0.0
      %1005 = vmatpush1.msra.mxu0 0.0
      %1006 = vmatprep.subr.mxu0 0.0
      %1007 = vmatpush1.msra.mxu0 0.0
      %1008 = vmatprep.subr.mxu0 0.0
      %1009 = vmatpush1.msra.mxu0 0.0
      %1010 = vmatprep.subr.mxu0 0.0
      %1011 = vmatpush1.msra.mxu0 0.0
      %1012 = vmatprep.subr.mxu0 0.0
      %1013 = vmatpush1.msra.mxu0 0.0
      %1014 = vmatprep.subr.mxu0 0.0
      %1015 = vmatpush1.msra.mxu0 0.0
      %1016 = vmatprep.subr.mxu0 0.0
      %1017 = vmatpush1.msra.mxu0 0.0
      %1018 = vmatprep.subr.mxu0 0.0
      %1019 = vmatpush1.msra.mxu0 0.0
      %1020 = vmatprep.subr.mxu0 0.0
      %1021 = vmatpush1.msra.mxu0 0.0
      %1022 = vmatprep.subr.mxu0 0.0
      %1023 = vmatpush1.msra.mxu0 0.0
      %1024 = vmatprep.subr.mxu0 0.0
      %1025 = vmatpush1.msra.mxu0 0.0
      %1026 = vmatprep.subr.mxu0 0.0
      %1027 = vmatpush1.msra.mxu0 0.0
      %1028 = vmatprep.subr.mxu0 0.0
      %1029 = vmatpush1.msra.mxu0 0.0
      %1030 = vmatprep.subr.mxu0 0.0
      %1031 = vmatpush1.msra.mxu0 0.0
      %1032 = vmatprep.subr.mxu0 0.0
      %1033 = vmatpush1.msra.mxu0 0.0
      %1034 = vmatprep.subr.mxu0 0.0
      %1035 = vmatpush1.msra.mxu0 0.0
      %1036 = vmatprep.mubr.f32.mxu0 0.0
      %1037 = vmatmul.mubr.f32.gmra.mrb[0].mxu0 %v970
      %v1038 = vpop.f32.mrb[0].mxu0
      %v1039 = vadd.f32 0.0, %v1038
      %v1040 = vpop.f32.mrb[0].mxu0
      %1041 = vdwg.mxu0
      %v1042 = vadd.f32 %v968, %v1039
      %v1043 = vxor.u32 %v1042, 2147483648
      %v1044 = vmul.f32 %v1043, 1.442695
      %v1045 = vpow.pop %v1044
      %v1046 = vadd.f32 %v1045, 1.0
      %v1047 = vrcp.pop %v1046
      %v1048 = vmul.f32 1.0, %v1047
      %1049 = vrot.lane.b32.xlu0 %v955, 64
      %v1050 = vpop.permute.xlu0 %1049
      %v1052 = vadd.f32 %v1039, %v1050
      %1054 = vrot.lane.b32.xlu0 %v1052, 64
      %v1055 = vpop.permute.xlu0 %1054
      %v1057 = vmul.f32 %v1048, %v1055
      %1059 = vrot.lane.b32.xlu0 %v1057, 64
      %v1060 = vpop.permute.xlu0 %1059
      %v1062 = vadd.f32 %v968, %v1060
      %v1063 = vtanh.pop %v1062
      %v1064 = vsub.f32 1.0, %v1048
      %1066 = vrot.lane.b32.xlu0 %v1063, 96
      %v1067 = vpop.permute.xlu0 %1066
      %v1069 = vmul.f32 %v1064, %v1067
      %1070 = vrot.lane.b32.xlu0 %v964, 32
      %v1071 = vpop.permute.xlu0 %1070
      %v1073 = vmul.f32 %v1048, %v1071
      %v1074 = vadd.f32 %v1069, %v1073
      %p1075 = scmp.eq.s32.totalorder %s959, 0
      %s1076 = scalar_select %p1075, 1, 0
      %v1077 = vstv %s1076
      %vm1078 = vcmp.eq.s32.totalorder %v1077, 1
      %v1079 = vsel %vm1078, %v1074, %v965
      %1081 = vrot.lane.b32.xlu0 %v1074, 96
      %v1082 = vpop.permute.xlu0 %1081
    $region116: #{decoder_rnn_forward.1} parent=1 // loop_footer
      %s963 = sadd.s32 1, %s959
    $region117: #{decoder_rnn_forward.1} parent=1 // loop_footer_branch
      %958 = sbr.rel target = $region113
    $region118: #{decoder_rnn_forward.1} parent=1 // loop_exit
      _
    %1085 = vrot.lane.b32.xlu0 %v964, 64
    %v1086 = vpop.permute.xlu0 %1085
    %vm1088 = vcmask 785920
    %1089 = vst.msk [vmem:[%s16] sm:$0xff] %vm1088, %v1086
    %s1090 = scalar_lea.vmem [#allocation11], 64
    %v1091 = vld [vmem:[%s1090] sm:$0xff]
    %v1092 = vld [vmem:[%s1090 + $0x8] sm:$0xff]
    %v1093 = vld [vmem:[%s1090 + $0x10] sm:$0xff]
    %v1094 = vld [vmem:[%s1090 + $0x18] sm:$0xff]
    %v1095 = vld [vmem:[%s1090 + $0x20] sm:$0xff]
    %v1096 = vld [vmem:[%s1090 + $0x28] sm:$0xff]
    %v1097 = vld [vmem:[%s1090 + $0x30] sm:$0xff]
    %v1098 = vld [vmem:[%s1090 + $0x38] sm:$0xff]
    %v1099 = vld [vmem:[#allocation3] sm:$0xff]
    %v1100 = vld [vmem:[#allocation3 + $0x8] sm:$0xff]
    %v1101 = vld [vmem:[#allocation3 + $0x10] sm:$0xff]
    %v1102 = vld [vmem:[#allocation3 + $0x18] sm:$0xff]
    %v1103 = vld [vmem:[#allocation3 + $0x20] sm:$0xff]
    %v1104 = vld [vmem:[#allocation4] sm:$0xff]
    %v1105 = vld [vmem:[#allocation4 + $0x8] sm:$0xff]
    %v1106 = vld [vmem:[#allocation4 + $0x10] sm:$0xff]
    %v1107 = vld [vmem:[#allocation4 + $0x18] sm:$0xff]
    %v1108 = vld [vmem:[#allocation4 + $0x20] sm:$0xff]
    %v1110 = vsel %vm430, %v1104, 0
    %v1113 = vsel %vm430, %v1105, 0
    %v1116 = vsel %vm430, %v1106, 0
    %v1119 = vsel %vm430, %v1107, 0
    %v1122 = vsel %vm430, %v1108, 0
    %1124 = vmatprep.subr.mxu0 0.0
    %1125 = vmatpush1.msra.mxu0 %v1095
    %1126 = vmatprep.subr.mxu0 0.0
    %1127 = vmatpush1.msra.mxu0 %v1096
    %1128 = vmatprep.subr.mxu0 0.0
    %1129 = vmatpush1.msra.mxu0 %v1097
    %1130 = vmatprep.subr.mxu0 0.0
    %1131 = vmatpush1.msra.mxu0 %v1098
    %1132 = vmatprep.subr.mxu0 0.0
    %1133 = vmatpush1.msra.mxu0 0.0
    %1134 = vmatprep.subr.mxu0 0.0
    %1135 = vmatpush1.msra.mxu0 0.0
    %1136 = vmatprep.subr.mxu0 0.0
    %1137 = vmatpush1.msra.mxu0 0.0
    %1138 = vmatprep.subr.mxu0 0.0
    %1139 = vmatpush1.msra.mxu0 0.0
    %1140 = vmatprep.subr.mxu0 0.0
    %1141 = vmatpush1.msra.mxu0 0.0
    %1142 = vmatprep.subr.mxu0 0.0
    %1143 = vmatpush1.msra.mxu0 0.0
    %1144 = vmatprep.subr.mxu0 0.0
    %1145 = vmatpush1.msra.mxu0 0.0
    %1146 = vmatprep.subr.mxu0 0.0
    %1147 = vmatpush1.msra.mxu0 0.0
    %1148 = vmatprep.subr.mxu0 0.0
    %1149 = vmatpush1.msra.mxu0 0.0
    %1150 = vmatprep.subr.mxu0 0.0
    %1151 = vmatpush1.msra.mxu0 0.0
    %1152 = vmatprep.subr.mxu0 0.0
    %1153 = vmatpush1.msra.mxu0 0.0
    %1154 = vmatprep.subr.mxu0 0.0
    %1155 = vmatpush1.msra.mxu0 0.0
    %1156 = vmatprep.subr.mxu0 0.0
    %1157 = vmatpush1.msra.mxu0 0.0
    %1158 = vmatprep.subr.mxu0 0.0
    %1159 = vmatpush1.msra.mxu0 0.0
    %1160 = vmatprep.subr.mxu0 0.0
    %1161 = vmatpush1.msra.mxu0 0.0
    %1162 = vmatprep.subr.mxu0 0.0
    %1163 = vmatpush1.msra.mxu0 0.0
    %1164 = vmatprep.subr.mxu0 0.0
    %1165 = vmatpush1.msra.mxu0 0.0
    %1166 = vmatprep.subr.mxu0 0.0
    %1167 = vmatpush1.msra.mxu0 0.0
    %1168 = vmatprep.subr.mxu0 0.0
    %1169 = vmatpush1.msra.mxu0 0.0
    %1170 = vmatprep.subr.mxu0 0.0
    %1171 = vmatpush1.msra.mxu0 0.0
    %1172 = vmatprep.subr.mxu0 0.0
    %1173 = vmatpush1.msra.mxu0 0.0
    %1174 = vmatprep.subr.mxu0 0.0
    %1175 = vmatpush1.msra.mxu0 0.0
    %1176 = vmatprep.subr.mxu0 0.0
    %1177 = vmatpush1.msra.mxu0 0.0
    %1178 = vmatprep.subr.mxu0 0.0
    %1179 = vmatpush1.msra.mxu0 0.0
    %1180 = vmatprep.subr.mxu0 0.0
    %1181 = vmatpush1.msra.mxu0 0.0
    %1182 = vmatprep.subr.mxu0 0.0
    %1183 = vmatpush1.msra.mxu0 0.0
    %1184 = vmatprep.subr.mxu0 0.0
    %1185 = vmatpush1.msra.mxu0 0.0
    %1186 = vmatprep.subr.mxu0 0.0
    %1187 = vmatpush1.msra.mxu0 0.0
    %1188 = vmatprep.mubr.f32.mxu0 0.0
    %1189 = vmatmul.mubr.f32.gmra.mrb[0].mxu0 %v1110
    %v1190 = vpop.f32.mrb[0].mxu0
    %v1191 = vadd.f32 0.0, %v1190
    %v1192 = vpop.f32.mrb[0].mxu0
    %1193 = vmatprep.mubr.f32.mxu0 0.0
    %1194 = vmatmul.mubr.f32.gmra.mrb[0].mxu0 %v1113
    %v1195 = vpop.f32.mrb[0].mxu0
    %v1196 = vadd.f32 0.0, %v1195
    %v1197 = vpop.f32.mrb[0].mxu0
    %1198 = vmatprep.mubr.f32.mxu0 0.0
    %1199 = vmatmul.mubr.f32.gmra.mrb[0].mxu0 %v1116
    %v1200 = vpop.f32.mrb[0].mxu0
    %v1201 = vadd.f32 0.0, %v1200
    %v1202 = vpop.f32.mrb[0].mxu0
    %1203 = vmatprep.mubr.f32.mxu0 0.0
    %1204 = vmatmul.mubr.f32.gmra.mrb[0].mxu0 %v1119
    %v1205 = vpop.f32.mrb[0].mxu0
    %v1206 = vadd.f32 0.0, %v1205
    %v1207 = vpop.f32.mrb[0].mxu0
    %1208 = vmatprep.mubr.f32.mxu0 0.0
    %1209 = vmatmul.mubr.f32.gmra.mrb[0].mxu0 %v1122
    %v1210 = vpop.f32.mrb[0].mxu0
    %v1211 = vadd.f32 0.0, %v1210
    %v1212 = vpop.f32.mrb[0].mxu0
    %1213 = vdwg.mxu0
    %v1215 = vsel %vm430, %v1099, 0
    %v1218 = vsel %vm430, %v1100, 0
    %v1221 = vsel %vm430, %v1101, 0
    %v1224 = vsel %vm430, %v1102, 0
    %v1227 = vsel %vm430, %v1103, 0
    %1229 = vmatprep.subr.mxu0 0.0
    %1230 = vmatpush1.msra.mxu0 %v1091
    %1231 = vmatprep.subr.mxu0 0.0
    %1232 = vmatpush1.msra.mxu0 %v1092
    %1233 = vmatprep.subr.mxu0 0.0
    %1234 = vmatpush1.msra.mxu0 %v1093
    %1235 = vmatprep.subr.mxu0 0.0
    %1236 = vmatpush1.msra.mxu0 %v1094
    %1237 = vmatprep.subr.mxu0 0.0
    %1238 = vmatpush1.msra.mxu0 0.0
    %1239 = vmatprep.subr.mxu0 0.0
    %1240 = vmatpush1.msra.mxu0 0.0
    %1241 = vmatprep.subr.mxu0 0.0
    %1242 = vmatpush1.msra.mxu0 0.0
    %1243 = vmatprep.subr.mxu0 0.0
    %1244 = vmatpush1.msra.mxu0 0.0
    %1245 = vmatprep.subr.mxu0 0.0
    %1246 = vmatpush1.msra.mxu0 0.0
    %1247 = vmatprep.subr.mxu0 0.0
    %1248 = vmatpush1.msra.mxu0 0.0
    %1249 = vmatprep.subr.mxu0 0.0
    %1250 = vmatpush1.msra.mxu0 0.0
    %1251 = vmatprep.subr.mxu0 0.0
    %1252 = vmatpush1.msra.mxu0 0.0
    %1253 = vmatprep.subr.mxu0 0.0
    %1254 = vmatpush1.msra.mxu0 0.0
    %1255 = vmatprep.subr.mxu0 0.0
    %1256 = vmatpush1.msra.mxu0 0.0
    %1257 = vmatprep.subr.mxu0 0.0
    %1258 = vmatpush1.msra.mxu0 0.0
    %1259 = vmatprep.subr.mxu0 0.0
    %1260 = vmatpush1.msra.mxu0 0.0
    %1261 = vmatprep.subr.mxu0 0.0
    %1262 = vmatpush1.msra.mxu0 0.0
    %1263 = vmatprep.subr.mxu0 0.0
    %1264 = vmatpush1.msra.mxu0 0.0
    %1265 = vmatprep.subr.mxu0 0.0
    %1266 = vmatpush1.msra.mxu0 0.0
    %1267 = vmatprep.subr.mxu0 0.0
    %1268 = vmatpush1.msra.mxu0 0.0
    %1269 = vmatprep.subr.mxu0 0.0
    %1270 = vmatpush1.msra.mxu0 0.0
    %1271 = vmatprep.subr.mxu0 0.0
    %1272 = vmatpush1.msra.mxu0 0.0
    %1273 = vmatprep.subr.mxu0 0.0
    %1274 = vmatpush1.msra.mxu0 0.0
    %1275 = vmatprep.subr.mxu0 0.0
    %1276 = vmatpush1.msra.mxu0 0.0
    %1277 = vmatprep.subr.mxu0 0.0
    %1278 = vmatpush1.msra.mxu0 0.0
    %1279 = vmatprep.subr.mxu0 0.0
    %1280 = vmatpush1.msra.mxu0 0.0
    %1281 = vmatprep.subr.mxu0 0.0
    %1282 = vmatpush1.msra.mxu0 0.0
    %1283 = vmatprep.subr.mxu0 0.0
    %1284 = vmatpush1.msra.mxu0 0.0
    %1285 = vmatprep.subr.mxu0 0.0
    %1286 = vmatpush1.msra.mxu0 0.0
    %1287 = vmatprep.subr.mxu0 0.0
    %1288 = vmatpush1.msra.mxu0 0.0
    %1289 = vmatprep.subr.mxu0 0.0
    %1290 = vmatpush1.msra.mxu0 0.0
    %1291 = vmatprep.subr.mxu0 0.0
    %1292 = vmatpush1.msra.mxu0 0.0
    %1293 = vmatprep.mubr.f32.mxu0 0.0
    %1294 = vmatmul.mubr.f32.gmra.mrb[0].mxu0 %v1215
    %v1295 = vpop.f32.mrb[0].mxu0
    %v1296 = vadd.f32 %v1191, %v1295
    %v1297 = vpop.f32.mrb[0].mxu0
    %1298 = vmatprep.mubr.f32.mxu0 0.0
    %1299 = vmatmul.mubr.f32.gmra.mrb[0].mxu0 %v1218
    %v1300 = vpop.f32.mrb[0].mxu0
    %v1301 = vadd.f32 %v1196, %v1300
    %v1302 = vpop.f32.mrb[0].mxu0
    %1303 = vmatprep.mubr.f32.mxu0 0.0
    %1304 = vmatmul.mubr.f32.gmra.mrb[0].mxu0 %v1221
    %v1305 = vpop.f32.mrb[0].mxu0
    %v1306 = vadd.f32 %v1201, %v1305
    %v1307 = vpop.f32.mrb[0].mxu0
    %1308 = vmatprep.mubr.f32.mxu0 0.0
    %1309 = vmatmul.mubr.f32.gmra.mrb[0].mxu0 %v1224
    %v1310 = vpop.f32.mrb[0].mxu0
    %v1311 = vadd.f32 %v1206, %v1310
    %v1312 = vpop.f32.mrb[0].mxu0
    %1313 = vmatprep.mubr.f32.mxu0 0.0
    %1314 = vmatmul.mubr.f32.gmra.mrb[0].mxu0 %v1227
    %v1315 = vpop.f32.mrb[0].mxu0
    %v1316 = vadd.f32 %v1211, %v1315
    %v1317 = vpop.f32.mrb[0].mxu0
    %1318 = vdwg.mxu0
    %s1319 = scalar_lea.vmem [#allocation14], 1
    %v1320 = vld [vmem:[%s1319] sm:$0x1]
    %v1322 = vlaneseq
    %v1323 = vshrl.u32 %v1322, 7
    %v1324 = vsub.s32 0, %v1323
    %v1325 = vrot.slane %v1320, %v1324
    %v1327 = vadd.f32 %v1296, %v1325
    %v1328 = vadd.f32 %v1301, %v1325
    %v1329 = vadd.f32 %v1306, %v1325
    %v1330 = vadd.f32 %v1311, %v1325
    %v1331 = vadd.f32 %v1316, %v1325
    %1332 = vst.msk [vmem:[#allocation2] sm:$0xff] %vm290, %v1327
    %1333 = vst.msk [vmem:[#allocation2 + $0x8] sm:$0xff] %vm290, %v1328
    %1334 = vst.msk [vmem:[#allocation2 + $0x10] sm:$0xff] %vm290, %v1329
    %1335 = vst.msk [vmem:[#allocation2 + $0x18] sm:$0xff] %vm290, %v1330
    %1336 = vst.msk [vmem:[#allocation2 + $0x20] sm:$0xff] %vm290, %v1331
    %s1337 = scalar_lea.vmem [#allocation12], 32
    %v1338 = vld [vmem:[%s1337] sm:$0xff]
    %v1339 = vld [vmem:[%s1337 + $0x8] sm:$0xff]
    %v1340 = vld [vmem:[%s1337 + $0x10] sm:$0xff]
    %v1341 = vld [vmem:[%s1337 + $0x18] sm:$0xff]
    %s1342 = scalar_lea.vmem [#allocation15], 1
    %v1343 = vld [vmem:[%s1342] sm:$0x1]
    %v1345 = vlaneseq
    %v1346 = vshrl.u32 %v1345, 7
    %v1347 = vsub.s32 0, %v1346
    %v1348 = vrot.slane %v1343, %v1347
    %s1349 = scalar_lea.vmem %s1, 24
    %v1350 = vld [vmem:[%s1349] sm:$0xff]
    loop: start=0, step=1, limit=5
    $region119: #{decoder_rnn_forward.1} parent=1 // loop_pre_header
      _
    $region120: #{decoder_rnn_forward.1} parent=1 // loop_header
      %s1352 = sphi 0, %s1356
      %p1353 = scmp.ge.s32.totalorder %s1352, 5
      %v1357 = vphi %v1350, %v1470
    $region121: #{decoder_rnn_forward.1} parent=1 // loop_header_branch
      %1355 = sbr.rel (%p1353) target = $region125
    $region122: #{decoder_rnn_forward.1} parent=1 // loop_body
      %s1358 = ssub.s32 4, %s1352
      %s1359 = smul.u32 %s1358, 8
      %s1360 = scalar_lea.vmem [#allocation2], %s1359
      %v1361 = vld [vmem:[%s1360] sm:$0xff]
      %v1363 = vsel %vm430, %v1357, 0
      %1365 = vmatprep.subr.mxu0 0.0
      %1366 = vmatpush1.msra.mxu0 %v1338
      %1367 = vmatprep.subr.mxu0 0.0
      %1368 = vmatpush1.msra.mxu0 %v1339
      %1369 = vmatprep.subr.mxu0 0.0
      %1370 = vmatpush1.msra.mxu0 %v1340
      %1371 = vmatprep.subr.mxu0 0.0
      %1372 = vmatpush1.msra.mxu0 %v1341
      %1373 = vmatprep.subr.mxu0 0.0
      %1374 = vmatpush1.msra.mxu0 0.0
      %1375 = vmatprep.subr.mxu0 0.0
      %1376 = vmatpush1.msra.mxu0 0.0
      %1377 = vmatprep.subr.mxu0 0.0
      %1378 = vmatpush1.msra.mxu0 0.0
      %1379 = vmatprep.subr.mxu0 0.0
      %1380 = vmatpush1.msra.mxu0 0.0
      %1381 = vmatprep.subr.mxu0 0.0
      %1382 = vmatpush1.msra.mxu0 0.0
      %1383 = vmatprep.subr.mxu0 0.0
      %1384 = vmatpush1.msra.mxu0 0.0
      %1385 = vmatprep.subr.mxu0 0.0
      %1386 = vmatpush1.msra.mxu0 0.0
      %1387 = vmatprep.subr.mxu0 0.0
      %1388 = vmatpush1.msra.mxu0 0.0
      %1389 = vmatprep.subr.mxu0 0.0
      %1390 = vmatpush1.msra.mxu0 0.0
      %1391 = vmatprep.subr.mxu0 0.0
      %1392 = vmatpush1.msra.mxu0 0.0
      %1393 = vmatprep.subr.mxu0 0.0
      %1394 = vmatpush1.msra.mxu0 0.0
      %1395 = vmatprep.subr.mxu0 0.0
      %1396 = vmatpush1.msra.mxu0 0.0
      %1397 = vmatprep.subr.mxu0 0.0
      %1398 = vmatpush1.msra.mxu0 0.0
      %1399 = vmatprep.subr.mxu0 0.0
      %1400 = vmatpush1.msra.mxu0 0.0
      %1401 = vmatprep.subr.mxu0 0.0
      %1402 = vmatpush1.msra.mxu0 0.0
      %1403 = vmatprep.subr.mxu0 0.0
      %1404 = vmatpush1.msra.mxu0 0.0
      %1405 = vmatprep.subr.mxu0 0.0
      %1406 = vmatpush1.msra.mxu0 0.0
      %1407 = vmatprep.subr.mxu0 0.0
      %1408 = vmatpush1.msra.mxu0 0.0
      %1409 = vmatprep.subr.mxu0 0.0
      %1410 = vmatpush1.msra.mxu0 0.0
      %1411 = vmatprep.subr.mxu0 0.0
      %1412 = vmatpush1.msra.mxu0 0.0
      %1413 = vmatprep.subr.mxu0 0.0
      %1414 = vmatpush1.msra.mxu0 0.0
      %1415 = vmatprep.subr.mxu0 0.0
      %1416 = vmatpush1.msra.mxu0 0.0
      %1417 = vmatprep.subr.mxu0 0.0
      %1418 = vmatpush1.msra.mxu0 0.0
      %1419 = vmatprep.subr.mxu0 0.0
      %1420 = vmatpush1.msra.mxu0 0.0
      %1421 = vmatprep.subr.mxu0 0.0
      %1422 = vmatpush1.msra.mxu0 0.0
      %1423 = vmatprep.subr.mxu0 0.0
      %1424 = vmatpush1.msra.mxu0 0.0
      %1425 = vmatprep.subr.mxu0 0.0
      %1426 = vmatpush1.msra.mxu0 0.0
      %1427 = vmatprep.subr.mxu0 0.0
      %1428 = vmatpush1.msra.mxu0 0.0
      %1429 = vmatprep.mubr.f32.mxu0 0.0
      %1430 = vmatmul.mubr.f32.gmra.mrb[0].mxu0 %v1363
      %v1431 = vpop.f32.mrb[0].mxu0
      %v1432 = vadd.f32 0.0, %v1431
      %v1433 = vpop.f32.mrb[0].mxu0
      %1434 = vdwg.mxu0
      %v1435 = vadd.f32 %v1361, %v1432
      %v1436 = vxor.u32 %v1435, 2147483648
      %v1437 = vmul.f32 %v1436, 1.442695
      %v1438 = vpow.pop %v1437
      %v1439 = vadd.f32 %v1438, 1.0
      %v1440 = vrcp.pop %v1439
      %v1441 = vmul.f32 1.0, %v1440
      %1442 = vrot.lane.b32.xlu0 %v1348, 64
      %v1443 = vpop.permute.xlu0 %1442
      %v1445 = vadd.f32 %v1432, %v1443
      %1447 = vrot.lane.b32.xlu0 %v1445, 64
      %v1448 = vpop.permute.xlu0 %1447
      %v1450 = vmul.f32 %v1441, %v1448
      %1452 = vrot.lane.b32.xlu0 %v1450, 64
      %v1453 = vpop.permute.xlu0 %1452
      %v1455 = vadd.f32 %v1361, %v1453
      %v1456 = vtanh.pop %v1455
      %v1457 = vsub.f32 1.0, %v1441
      %1459 = vrot.lane.b32.xlu0 %v1456, 96
      %v1460 = vpop.permute.xlu0 %1459
      %v1462 = vmul.f32 %v1457, %v1460
      %1463 = vrot.lane.b32.xlu0 %v1357, 32
      %v1464 = vpop.permute.xlu0 %1463
      %v1466 = vmul.f32 %v1441, %v1464
      %v1467 = vadd.f32 %v1462, %v1466
      %1469 = vrot.lane.b32.xlu0 %v1467, 96
      %v1470 = vpop.permute.xlu0 %1469
    $region123: #{decoder_rnn_forward.1} parent=1 // loop_footer
      %s1356 = sadd.s32 1, %s1352
    $region124: #{decoder_rnn_forward.1} parent=1 // loop_footer_branch
      %1351 = sbr.rel target = $region120
    $region125: #{decoder_rnn_forward.1} parent=1 // loop_exit
      _
    %1473 = vrot.lane.b32.xlu0 %v1357, 96
    %v1474 = vpop.permute.xlu0 %1473
    %vm1476 = vcmask 1048320
    %1477 = vst.msk [vmem:[%s16] sm:$0xff] %vm1476, %v1474
    %v1478 = vld [vmem:[%s11] sm:$0xff]
    %v1479 = vld [vmem:[%s11 + $0x8] sm:$0xff]
    %v1480 = vld [vmem:[%s11 + $0x10] sm:$0xff]
    %v1481 = vld [vmem:[%s11 + $0x18] sm:$0xff]
    %v1482 = vld [vmem:[#allocation17] sm:$0xff]
    %v1483 = vld [vmem:[#allocation17 + $0x8] sm:$0xff]
    %v1484 = vld [vmem:[#allocation17 + $0x10] sm:$0xff]
    %v1485 = vld [vmem:[#allocation17 + $0x18] sm:$0xff]
    %v1486 = vsel %vm430, %v1357, 0
    %1488 = vmatprep.subr.mxu0 0.0
    %1489 = vmatpush1.msra.mxu0 %v1482
    %1490 = vmatprep.subr.mxu0 0.0
    %1491 = vmatpush1.msra.mxu0 %v1483
    %1492 = vmatprep.subr.mxu0 0.0
    %1493 = vmatpush1.msra.mxu0 %v1484
    %1494 = vmatprep.subr.mxu0 0.0
    %1495 = vmatpush1.msra.mxu0 %v1485
    %1496 = vmatprep.subr.mxu0 0.0
    %1497 = vmatpush1.msra.mxu0 0.0
    %1498 = vmatprep.subr.mxu0 0.0
    %1499 = vmatpush1.msra.mxu0 0.0
    %1500 = vmatprep.subr.mxu0 0.0
    %1501 = vmatpush1.msra.mxu0 0.0
    %1502 = vmatprep.subr.mxu0 0.0
    %1503 = vmatpush1.msra.mxu0 0.0
    %1504 = vmatprep.subr.mxu0 0.0
    %1505 = vmatpush1.msra.mxu0 0.0
    %1506 = vmatprep.subr.mxu0 0.0
    %1507 = vmatpush1.msra.mxu0 0.0
    %1508 = vmatprep.subr.mxu0 0.0
    %1509 = vmatpush1.msra.mxu0 0.0
    %1510 = vmatprep.subr.mxu0 0.0
    %1511 = vmatpush1.msra.mxu0 0.0
    %1512 = vmatprep.subr.mxu0 0.0
    %1513 = vmatpush1.msra.mxu0 0.0
    %1514 = vmatprep.subr.mxu0 0.0
    %1515 = vmatpush1.msra.mxu0 0.0
    %1516 = vmatprep.subr.mxu0 0.0
    %1517 = vmatpush1.msra.mxu0 0.0
    %1518 = vmatprep.subr.mxu0 0.0
    %1519 = vmatpush1.msra.mxu0 0.0
    %1520 = vmatprep.subr.mxu0 0.0
    %1521 = vmatpush1.msra.mxu0 0.0
    %1522 = vmatprep.subr.mxu0 0.0
    %1523 = vmatpush1.msra.mxu0 0.0
    %1524 = vmatprep.subr.mxu0 0.0
    %1525 = vmatpush1.msra.mxu0 0.0
    %1526 = vmatprep.subr.mxu0 0.0
    %1527 = vmatpush1.msra.mxu0 0.0
    %1528 = vmatprep.subr.mxu0 0.0
    %1529 = vmatpush1.msra.mxu0 0.0
    %1530 = vmatprep.subr.mxu0 0.0
    %1531 = vmatpush1.msra.mxu0 0.0
    %1532 = vmatprep.subr.mxu0 0.0
    %1533 = vmatpush1.msra.mxu0 0.0
    %1534 = vmatprep.subr.mxu0 0.0
    %1535 = vmatpush1.msra.mxu0 0.0
    %1536 = vmatprep.subr.mxu0 0.0
    %1537 = vmatpush1.msra.mxu0 0.0
    %1538 = vmatprep.subr.mxu0 0.0
    %1539 = vmatpush1.msra.mxu0 0.0
    %1540 = vmatprep.subr.mxu0 0.0
    %1541 = vmatpush1.msra.mxu0 0.0
    %1542 = vmatprep.subr.mxu0 0.0
    %1543 = vmatpush1.msra.mxu0 0.0
    %1544 = vmatprep.subr.mxu0 0.0
    %1545 = vmatpush1.msra.mxu0 0.0
    %1546 = vmatprep.subr.mxu0 0.0
    %1547 = vmatpush1.msra.mxu0 0.0
    %1548 = vmatprep.subr.mxu0 0.0
    %1549 = vmatpush1.msra.mxu0 0.0
    %1550 = vmatprep.subr.mxu0 0.0
    %1551 = vmatpush1.msra.mxu0 0.0
    %1552 = vmatprep.mubr.f32.mxu0 0.0
    %1553 = vmatmul.mubr.f32.gmra.mrb[0].mxu0 %v1486
    %v1554 = vpop.f32.mrb[0].mxu0
    %v1555 = vadd.f32 0.0, %v1554
    %v1556 = vpop.f32.mrb[0].mxu0
    %1557 = vdwg.mxu0
    %1559 = vrot.lane.b32.xlu0 %v965, 96
    %v1560 = vpop.permute.xlu0 %1559
    %v1561 = vsel %vm430, %v1560, 0
    %1563 = vmatprep.subr.mxu0 0.0
    %1564 = vmatpush1.msra.mxu0 %v1478
    %1565 = vmatprep.subr.mxu0 0.0
    %1566 = vmatpush1.msra.mxu0 %v1479
    %1567 = vmatprep.subr.mxu0 0.0
    %1568 = vmatpush1.msra.mxu0 %v1480
    %1569 = vmatprep.subr.mxu0 0.0
    %1570 = vmatpush1.msra.mxu0 %v1481
    %1571 = vmatprep.subr.mxu0 0.0
    %1572 = vmatpush1.msra.mxu0 0.0
    %1573 = vmatprep.subr.mxu0 0.0
    %1574 = vmatpush1.msra.mxu0 0.0
    %1575 = vmatprep.subr.mxu0 0.0
    %1576 = vmatpush1.msra.mxu0 0.0
    %1577 = vmatprep.subr.mxu0 0.0
    %1578 = vmatpush1.msra.mxu0 0.0
    %1579 = vmatprep.subr.mxu0 0.0
    %1580 = vmatpush1.msra.mxu0 0.0
    %1581 = vmatprep.subr.mxu0 0.0
    %1582 = vmatpush1.msra.mxu0 0.0
    %1583 = vmatprep.subr.mxu0 0.0
    %1584 = vmatpush1.msra.mxu0 0.0
    %1585 = vmatprep.subr.mxu0 0.0
    %1586 = vmatpush1.msra.mxu0 0.0
    %1587 = vmatprep.subr.mxu0 0.0
    %1588 = vmatpush1.msra.mxu0 0.0
    %1589 = vmatprep.subr.mxu0 0.0
    %1590 = vmatpush1.msra.mxu0 0.0
    %1591 = vmatprep.subr.mxu0 0.0
    %1592 = vmatpush1.msra.mxu0 0.0
    %1593 = vmatprep.subr.mxu0 0.0
    %1594 = vmatpush1.msra.mxu0 0.0
    %1595 = vmatprep.subr.mxu0 0.0
    %1596 = vmatpush1.msra.mxu0 0.0
    %1597 = vmatprep.subr.mxu0 0.0
    %1598 = vmatpush1.msra.mxu0 0.0
    %1599 = vmatprep.subr.mxu0 0.0
    %1600 = vmatpush1.msra.mxu0 0.0
    %1601 = vmatprep.subr.mxu0 0.0
    %1602 = vmatpush1.msra.mxu0 0.0
    %1603 = vmatprep.subr.mxu0 0.0
    %1604 = vmatpush1.msra.mxu0 0.0
    %1605 = vmatprep.subr.mxu0 0.0
    %1606 = vmatpush1.msra.mxu0 0.0
    %1607 = vmatprep.subr.mxu0 0.0
    %1608 = vmatpush1.msra.mxu0 0.0
    %1609 = vmatprep.subr.mxu0 0.0
    %1610 = vmatpush1.msra.mxu0 0.0
    %1611 = vmatprep.subr.mxu0 0.0
    %1612 = vmatpush1.msra.mxu0 0.0
    %1613 = vmatprep.subr.mxu0 0.0
    %1614 = vmatpush1.msra.mxu0 0.0
    %1615 = vmatprep.subr.mxu0 0.0
    %1616 = vmatpush1.msra.mxu0 0.0
    %1617 = vmatprep.subr.mxu0 0.0
    %1618 = vmatpush1.msra.mxu0 0.0
    %1619 = vmatprep.subr.mxu0 0.0
    %1620 = vmatpush1.msra.mxu0 0.0
    %1621 = vmatprep.subr.mxu0 0.0
    %1622 = vmatpush1.msra.mxu0 0.0
    %1623 = vmatprep.subr.mxu0 0.0
    %1624 = vmatpush1.msra.mxu0 0.0
    %1625 = vmatprep.subr.mxu0 0.0
    %1626 = vmatpush1.msra.mxu0 0.0
    %1627 = vmatprep.mubr.f32.mxu0 0.0
    %1628 = vmatmul.mubr.f32.gmra.mrb[0].mxu0 %v1561
    %v1629 = vpop.f32.mrb[0].mxu0
    %v1630 = vadd.f32 %v1555, %v1629
    %v1631 = vpop.f32.mrb[0].mxu0
    %1632 = vdwg.mxu0
    %v1633 = vld [vmem:[%s2] sm:$0xff]
    %v1634 = vld [vmem:[#allocation18] sm:$0xff]
    %vm1635 = vcmask 64512
    %v1637 = vsel %vm1635, %v1633, 0
    %1639 = vmatprep.subr.mxu0 0.0
    %1640 = vmatpush1.msra.mxu0 %v1634
    %1641 = vmatprep.subr.mxu0 0.0
    %1642 = vmatpush1.msra.mxu0 0.0
    %1643 = vmatprep.subr.mxu0 0.0
    %1644 = vmatpush1.msra.mxu0 0.0
    %1645 = vmatprep.subr.mxu0 0.0
    %1646 = vmatpush1.msra.mxu0 0.0
    %1647 = vmatprep.subr.mxu0 0.0
    %1648 = vmatpush1.msra.mxu0 0.0
    %1649 = vmatprep.subr.mxu0 0.0
    %1650 = vmatpush1.msra.mxu0 0.0
    %1651 = vmatprep.subr.mxu0 0.0
    %1652 = vmatpush1.msra.mxu0 0.0
    %1653 = vmatprep.subr.mxu0 0.0
    %1654 = vmatpush1.msra.mxu0 0.0
    %1655 = vmatprep.subr.mxu0 0.0
    %1656 = vmatpush1.msra.mxu0 0.0
    %1657 = vmatprep.subr.mxu0 0.0
    %1658 = vmatpush1.msra.mxu0 0.0
    %1659 = vmatprep.subr.mxu0 0.0
    %1660 = vmatpush1.msra.mxu0 0.0
    %1661 = vmatprep.subr.mxu0 0.0
    %1662 = vmatpush1.msra.mxu0 0.0
    %1663 = vmatprep.subr.mxu0 0.0
    %1664 = vmatpush1.msra.mxu0 0.0
    %1665 = vmatprep.subr.mxu0 0.0
    %1666 = vmatpush1.msra.mxu0 0.0
    %1667 = vmatprep.subr.mxu0 0.0
    %1668 = vmatpush1.msra.mxu0 0.0
    %1669 = vmatprep.subr.mxu0 0.0
    %1670 = vmatpush1.msra.mxu0 0.0
    %1671 = vmatprep.subr.mxu0 0.0
    %1672 = vmatpush1.msra.mxu0 0.0
    %1673 = vmatprep.subr.mxu0 0.0
    %1674 = vmatpush1.msra.mxu0 0.0
    %1675 = vmatprep.subr.mxu0 0.0
    %1676 = vmatpush1.msra.mxu0 0.0
    %1677 = vmatprep.subr.mxu0 0.0
    %1678 = vmatpush1.msra.mxu0 0.0
    %1679 = vmatprep.subr.mxu0 0.0
    %1680 = vmatpush1.msra.mxu0 0.0
    %1681 = vmatprep.subr.mxu0 0.0
    %1682 = vmatpush1.msra.mxu0 0.0
    %1683 = vmatprep.subr.mxu0 0.0
    %1684 = vmatpush1.msra.mxu0 0.0
    %1685 = vmatprep.subr.mxu0 0.0
    %1686 = vmatpush1.msra.mxu0 0.0
    %1687 = vmatprep.subr.mxu0 0.0
    %1688 = vmatpush1.msra.mxu0 0.0
    %1689 = vmatprep.subr.mxu0 0.0
    %1690 = vmatpush1.msra.mxu0 0.0
    %1691 = vmatprep.subr.mxu0 0.0
    %1692 = vmatpush1.msra.mxu0 0.0
    %1693 = vmatprep.subr.mxu0 0.0
    %1694 = vmatpush1.msra.mxu0 0.0
    %1695 = vmatprep.subr.mxu0 0.0
    %1696 = vmatpush1.msra.mxu0 0.0
    %1697 = vmatprep.subr.mxu0 0.0
    %1698 = vmatpush1.msra.mxu0 0.0
    %1699 = vmatprep.subr.mxu0 0.0
    %1700 = vmatpush1.msra.mxu0 0.0
    %1701 = vmatprep.subr.mxu0 0.0
    %1702 = vmatpush1.msra.mxu0 0.0
    %1703 = vmatprep.mubr.f32.mxu0 0.0
    %1704 = vmatmul.mubr.f32.gmra.mrb[0].mxu0 %v1637
    %v1705 = vpop.f32.mrb[0].mxu0
    %v1706 = vadd.f32 0.0, %v1705
    %v1707 = vpop.f32.mrb[0].mxu0
    %1708 = vdwg.mxu0
    %v1709 = vadd.f32 %v1630, %v1706
    %v1710 = vld [vmem:[#allocation20] sm:$0x1]
    %v1712 = vlaneseq
    %v1713 = vshrl.u32 %v1712, 7
    %v1714 = vsub.s32 0, %v1713
    %v1715 = vrot.slane %v1710, %v1714
    %v1717 = vadd.f32 %v1709, %v1715
    %1718 = vst [vmem:[%s15] sm:$0xff] %v1717
    // Predicated region
    $region126: #{decoder_rnn_forward.1} parent=1 // pred_check
      _
    $region127: #{decoder_rnn_forward.1} parent=1 // pred_check_branch
      %1720 = sbr.rel (0) target = $region129
    $region128: #{decoder_rnn_forward.1} parent=1 // pred_region
      _
    $region129: #{decoder_rnn_forward.1} parent=1 // pred_fallthru
      _
    // Predicated region
    $region130: #{decoder_rnn_forward.1} parent=1 // pred_check
      _
    $region131: #{decoder_rnn_forward.1} parent=1 // pred_check_branch
      %1722 = sbr.rel (0) target = $region133
    $region132: #{decoder_rnn_forward.1} parent=1 // pred_region
      _
    $region133: #{decoder_rnn_forward.1} parent=1 // pred_fallthru
      _
    // Predicated region
    $region134: #{decoder_rnn_forward.1} parent=1 // pred_check
      _
    $region135: #{decoder_rnn_forward.1} parent=1 // pred_check_branch
      %1724 = sbr.rel (0) target = $region137
    $region136: #{decoder_rnn_forward.1} parent=1 // pred_region
      _
    $region137: #{decoder_rnn_forward.1} parent=1 // pred_fallthru
      _
    // Predicated region
    $region138: #{decoder_rnn_forward.1} parent=1 // pred_check
      _
    $region139: #{decoder_rnn_forward.1} parent=1 // pred_check_branch
      %1726 = sbr.rel (0) target = $region141
    $region140: #{decoder_rnn_forward.1} parent=1 // pred_region
      _
    $region141: #{decoder_rnn_forward.1} parent=1 // pred_fallthru
      _
    %1727 = vsyncpa [#allocation8], 1
    %1728 = vsyncpa [#allocation10], 1
    %1729 = vsyncpa [#allocation13], 1
    %1730 = vsyncpa [#allocation16], 1
    %1731 = vsyncpa [#allocation19], 1

</llo_original>
